<compile_context>
chip_gen: v6e
topology: v6e:2x2x1
jax: 0.10.0
libtpu: 0.0.40
codegen_flags: <defaults>
</compile_context>

<pallas_src>
import math

import jax
import jax.numpy as jnp
from jax.experimental import pallas as pl
from jax.experimental.pallas import tpu as pltpu


def _round_up(n, m):
    return ((n + m - 1) // m) * m


def _pad_axis(x, target, axis):
    pad = target - x.shape[axis]
    if pad <= 0:
        return x
    widths = [(0, 0)] * x.ndim
    widths[axis] = (0, pad)
    return jnp.pad(x, widths)


# -----------------------------------------------------------------------------
# Pallas kernel
# -----------------------------------------------------------------------------
def _make_elman_kernel(num_layers: int, seq_len: int, batch: int):
    """Kernel ref order:
        x_ref (S*B, In0)  -- time-major flattened input
        [w_ihT_l (In_l, Hp), w_hhT_l (Hp, Hp), b_l (1, Hp)] * num_layers
        w_projT (Hp, Op), b_proj (1, Op)
        out_ref (B, Op)
        seq_ref (S*B, Hp)   -- VMEM scratch holding the inter-layer sequence
    All padded lanes are zero and stay zero through the recurrence (tanh(0)=0).
    """

    def kernel(*refs):
        x_ref = refs[0]
        layer_refs = refs[1:1 + 3 * num_layers]
        w_projT_ref = refs[1 + 3 * num_layers]
        b_proj_ref = refs[2 + 3 * num_layers]
        out_ref = refs[3 + 3 * num_layers]
        seq_ref = refs[4 + 3 * num_layers]

        h = None
        for l in range(num_layers):
            w_ihT = layer_refs[3 * l][...]        # (In_l, Hp)
            w_hhT = layer_refs[3 * l + 1][...]    # (Hp, Hp)
            bias = layer_refs[3 * l + 2][...]     # (1, Hp)
            hp = w_hhT.shape[0]
            last_layer = (l == num_layers - 1)

            # Hot path #1: input projection for all timesteps in one MXU matmul.
            x_flat = x_ref[...] if l == 0 else seq_ref[...]        # (S*B, In_l)
            x_proj = jnp.dot(x_flat, w_ihT,
                             preferred_element_type=jnp.float32) + bias  # (S*B, Hp)

            # Hot path #2: sequential recurrence, time-major leading-axis slices.
            h = jnp.zeros((batch, hp), jnp.float32)
            for t in range(seq_len):
                xt = x_proj[t * batch:(t + 1) * batch, :]           # (B, Hp)
                h = jnp.tanh(
                    xt + jnp.dot(h, w_hhT, preferred_element_type=jnp.float32))
                if not last_layer:
                    # contiguous leading-axis store of the next layer's input
                    seq_ref[t * batch:(t + 1) * batch, :] = h

        # Projection of the final hidden state of the last layer.
        y = jnp.dot(h, w_projT_ref[...], preferred_element_type=jnp.float32)
        y = y + b_proj_ref[...]
        out_ref[...] = y.astype(out_ref.dtype)

    return kernel


# -----------------------------------------------------------------------------
# Wrapper (mirrors Model.forward signature)
# -----------------------------------------------------------------------------
def elman_forward(params, configs, x_enc, x_mark_enc=None, x_dec=None,
                  x_mark_dec=None, mask=None):
    """Pallas-backed equivalent of Model.forward.  Extra args are ignored
    (they are unused in the PyTorch forward as well)."""
    batch = x_enc.shape[0]
    seq_len = configs["seq_len"]
    pred_len = configs["pred_len"]
    c_out = configs["c_out"]
    d_model = configs["d_model"]
    e_layers = configs["e_layers"]

    out_dim = pred_len * c_out
    hp = _round_up(d_model, 128)      # lane-dense hidden width
    op = _round_up(out_dim, 128)      # lane-dense projection width

    # Host-side time-major flatten: (B, S, In) -> (S, B, In) -> (S*B, In).
    x_tm = jnp.transpose(x_enc.astype(jnp.float32), (1, 0, 2))
    x_tm = x_tm.reshape(seq_len * batch, x_enc.shape[2])

    flat_inputs = [x_tm]
    for l in range(e_layers):
        w_ihT = params[f"w_ihT_{l}"]                    # (in_dim, H)
        w_hhT = params[f"w_hhT_{l}"]                    # (H, H)
        b = params[f"b_{l}"]                            # (1, H)
        w_ihT_p = _pad_axis(w_ihT, hp, 1)
        if l > 0:
            w_ihT_p = _pad_axis(w_ihT_p, hp, 0)         # contraction dim = prev H
        w_hhT_p = _pad_axis(_pad_axis(w_hhT, hp, 0), hp, 1)
        b_p = _pad_axis(b, hp, 1)
        flat_inputs += [w_ihT_p, w_hhT_p, b_p]

    w_projT_p = _pad_axis(_pad_axis(params["w_projT"], hp, 0), op, 1)
    b_proj_p = _pad_axis(params["b_proj"], op, 1)
    flat_inputs += [w_projT_p, b_proj_p]

    n_in = len(flat_inputs)
    kernel = _make_elman_kernel(e_layers, seq_len, batch)

    out_padded = pl.pallas_call(
        kernel,
        out_shape=jax.ShapeDtypeStruct((batch, op), jnp.float32),
        in_specs=[pl.BlockSpec(memory_space=pltpu.MemorySpace.VMEM)] * n_in,
        out_specs=pl.BlockSpec(memory_space=pltpu.MemorySpace.VMEM),
        scratch_shapes=[pltpu.VMEM((seq_len * batch, hp), jnp.float32)],
    )(*flat_inputs)

    return out_padded[:, :out_dim].reshape(batch, pred_len, c_out)


# -----------------------------------------------------------------------------
# Deterministic parameter init (PyTorch-style uniform(-1/sqrt(H), 1/sqrt(H)))
# -----------------------------------------------------------------------------
def init_params(key, configs):
    enc_in = configs["enc_in"]
    d_model = configs["d_model"]
    e_layers = configs["e_layers"]
    pred_len = configs["pred_len"]
    c_out = configs["c_out"]

    params = {}
    stdv = 1.0 / math.sqrt(d_model)
    for l in range(e_layers):
        in_dim = enc_in if l == 0 else d_model
        key, k1, k2, k3, k4 = jax.random.split(key, 5)
        w_ih = jax.random.uniform(k1, (d_model, in_dim), jnp.float32, -stdv, stdv)
        w_hh = jax.random.uniform(k2, (d_model, d_model), jnp.float32, -stdv, stdv)
        b_ih = jax.random.uniform(k3, (d_model,), jnp.float32, -stdv, stdv)
        b_hh = jax.random.uniform(k4, (d_model,), jnp.float32, -stdv, stdv)
        params[f"w_ihT_{l}"] = jnp.transpose(w_ih)                  # (in_dim, H)
        params[f"w_hhT_{l}"] = jnp.transpose(w_hh)                  # (H, H)
        params[f"b_{l}"] = (b_ih + b_hh).reshape(1, d_model)        # (1, H)

    out_dim = pred_len * c_out
    stdv_p = 1.0 / math.sqrt(d_model)
    key, k1, k2 = jax.random.split(key, 3)
    w_proj = jax.random.uniform(k1, (out_dim, d_model), jnp.float32, -stdv_p, stdv_p)
    b_proj = jax.random.uniform(k2, (out_dim,), jnp.float32, -stdv_p, stdv_p)
    params["w_projT"] = jnp.transpose(w_proj)                       # (H, P*C)
    params["b_proj"] = b_proj.reshape(1, out_dim)
    return params


# -----------------------------------------------------------------------------
# Pure-JAX reference (for correctness check)
# -----------------------------------------------------------------------------
def elman_reference(params, configs, x_enc):
    seq_len = configs["seq_len"]
    e_layers = configs["e_layers"]
    pred_len = configs["pred_len"]
    c_out = configs["c_out"]
    batch = x_enc.shape[0]

    inp = x_enc.astype(jnp.float32)
    for l in range(e_layers):
        w_ihT = params[f"w_ihT_{l}"]
        w_hhT = params[f"w_hhT_{l}"]
        b = params[f"b_{l}"]
        hidden = w_hhT.shape[0]
        h = jnp.zeros((batch, hidden), jnp.float32)
        outs = []
        for t in range(seq_len):
            h = jnp.tanh(inp[:, t, :] @ w_ihT + b + h @ w_hhT)
            outs.append(h)
        inp = jnp.stack(outs, axis=1)
    y = inp[:, -1, :] @ params["w_projT"] + params["b_proj"]
    return y.reshape(batch, pred_len, c_out)


# -----------------------------------------------------------------------------
if __name__ == "__main__":
    configs = dict(
        seq_len=8,
        pred_len=4,
        enc_in=4,
        c_out=4,
        d_model=32,
        e_layers=2,
        dropout=0.1,
    )
    batch = 2

    key = jax.random.PRNGKey(0)
    key, kx, kmx, kxd, kmd, kp = jax.random.split(key, 6)

    x_enc = jax.random.normal(kx, (batch, configs["seq_len"], configs["enc_in"]),
                              jnp.float32)
    x_mark_enc = jax.random.normal(kmx, (batch, configs["seq_len"], 4), jnp.float32)
    x_dec = jax.random.normal(kxd, (batch, configs["pred_len"], configs["enc_in"]),
                              jnp.float32)
    x_mark_dec = jax.random.normal(kmd, (batch, configs["pred_len"], 4), jnp.float32)

    params = init_params(kp, configs)

    out = elman_forward(params, configs, x_enc, x_mark_enc, x_dec, x_mark_dec)
    out = jax.block_until_ready(out)

    ref = elman_reference(params, configs, x_enc)
    assert out.shape == (batch, configs["pred_len"], configs["c_out"]), out.shape
    assert jnp.allclose(out, ref, rtol=1e-5, atol=1e-5), "mismatch vs JAX reference"

    print("KERNEL_OK")
</pallas_src>

<mosaic_0001>
module attributes {stable_mosaic.version = 11 : i64} {
  func.func @kernel(%arg0: memref<16x4xf32, #tpu.memory_space<vmem>>, %arg1: memref<4x128xf32, #tpu.memory_space<vmem>>, %arg2: memref<128x128xf32, #tpu.memory_space<vmem>>, %arg3: memref<1x128xf32, #tpu.memory_space<vmem>>, %arg4: memref<128x128xf32, #tpu.memory_space<vmem>>, %arg5: memref<128x128xf32, #tpu.memory_space<vmem>>, %arg6: memref<1x128xf32, #tpu.memory_space<vmem>>, %arg7: memref<128x128xf32, #tpu.memory_space<vmem>>, %arg8: memref<1x128xf32, #tpu.memory_space<vmem>>, %arg9: memref<2x128xf32, #tpu.memory_space<vmem>>, %arg10: memref<16x128xf32, #tpu.memory_space<vmem>>) attributes {dimension_semantics = [], scalar_prefetch = 0 : i64, scratch_operands = 1 : i64, tpu.core_type = #tpu.core_type<tc>} {
    %c0 = arith.constant 0 : index
    %c0_0 = arith.constant 0 : index
    %0 = vector.load %arg1[%c0, %c0_0] : memref<4x128xf32, #tpu.memory_space<vmem>>, vector<4x128xf32>
    %c0_1 = arith.constant 0 : index
    %c0_2 = arith.constant 0 : index
    %1 = vector.load %arg2[%c0_1, %c0_2] : memref<128x128xf32, #tpu.memory_space<vmem>>, vector<128x128xf32>
    %c0_3 = arith.constant 0 : index
    %c0_4 = arith.constant 0 : index
    %2 = vector.load %arg3[%c0_3, %c0_4] : memref<1x128xf32, #tpu.memory_space<vmem>>, vector<1x128xf32>
    %c0_5 = arith.constant 0 : index
    %c0_6 = arith.constant 0 : index
    %3 = vector.load %arg0[%c0_5, %c0_6] : memref<16x4xf32, #tpu.memory_space<vmem>>, vector<16x4xf32>
    %cst = arith.constant dense<0.000000e+00> : vector<16x128xf32>
    %4 = tpu.matmul %3, %0, %cst {dimension_numbers = #tpu.dot_dimension_numbers<[1], [0], [0], [1], [0, 0, 1, 1], [], []>} : vector<16x4xf32>, vector<4x128xf32>, vector<16x128xf32> -> vector<16x128xf32>
    %5 = vector.broadcast %2 : vector<1x128xf32> to vector<16x128xf32>
    %6 = arith.addf %4, %5 : vector<16x128xf32>
    %cst_7 = arith.constant 0.000000e+00 : f32
    %7 = vector.broadcast %cst_7 : f32 to vector<2x128xf32>
    %8 = vector.extract_strided_slice %6 {offsets = [0, 0], sizes = [2, 128], strides = [1, 1]} : vector<16x128xf32> to vector<2x128xf32>
    %cst_8 = arith.constant dense<0.000000e+00> : vector<2x128xf32>
    %9 = tpu.matmul %7, %1, %cst_8 {dimension_numbers = #tpu.dot_dimension_numbers<[1], [0], [0], [1], [0, 0, 1, 1], [], []>} : vector<2x128xf32>, vector<128x128xf32>, vector<2x128xf32> -> vector<2x128xf32>
    %10 = arith.addf %8, %9 : vector<2x128xf32>
    %11 = math.tanh %10 : vector<2x128xf32>
    %c0_9 = arith.constant 0 : index
    %c0_10 = arith.constant 0 : index
    %12 = vector.load %arg10[%c0_9, %c0_10] : memref<16x128xf32, #tpu.memory_space<vmem>>, vector<2x128xf32>
    tpu.vector_store %arg10[%c0_9, %c0_10], %11 {strides = array<i32>} : memref<16x128xf32, #tpu.memory_space<vmem>>, vector<2x128xf32>,
    %13 = vector.extract_strided_slice %6 {offsets = [2, 0], sizes = [2, 128], strides = [1, 1]} : vector<16x128xf32> to vector<2x128xf32>
    %cst_11 = arith.constant dense<0.000000e+00> : vector<2x128xf32>
    %14 = tpu.matmul %11, %1, %cst_11 {dimension_numbers = #tpu.dot_dimension_numbers<[1], [0], [0], [1], [0, 0, 1, 1], [], []>} : vector<2x128xf32>, vector<128x128xf32>, vector<2x128xf32> -> vector<2x128xf32>
    %15 = arith.addf %13, %14 : vector<2x128xf32>
    %16 = math.tanh %15 : vector<2x128xf32>
    %c2 = arith.constant 2 : index
    %c0_12 = arith.constant 0 : index
    %17 = vector.load %arg10[%c2, %c0_12] : memref<16x128xf32, #tpu.memory_space<vmem>>, vector<2x128xf32>
    tpu.vector_store %arg10[%c2, %c0_12], %16 {strides = array<i32>} : memref<16x128xf32, #tpu.memory_space<vmem>>, vector<2x128xf32>,
    %18 = vector.extract_strided_slice %6 {offsets = [4, 0], sizes = [2, 128], strides = [1, 1]} : vector<16x128xf32> to vector<2x128xf32>
    %cst_13 = arith.constant dense<0.000000e+00> : vector<2x128xf32>
    %19 = tpu.matmul %16, %1, %cst_13 {dimension_numbers = #tpu.dot_dimension_numbers<[1], [0], [0], [1], [0, 0, 1, 1], [], []>} : vector<2x128xf32>, vector<128x128xf32>, vector<2x128xf32> -> vector<2x128xf32>
    %20 = arith.addf %18, %19 : vector<2x128xf32>
    %21 = math.tanh %20 : vector<2x128xf32>
    %c4 = arith.constant 4 : index
    %c0_14 = arith.constant 0 : index
    %22 = vector.load %arg10[%c4, %c0_14] : memref<16x128xf32, #tpu.memory_space<vmem>>, vector<2x128xf32>
    tpu.vector_store %arg10[%c4, %c0_14], %21 {strides = array<i32>} : memref<16x128xf32, #tpu.memory_space<vmem>>, vector<2x128xf32>,
    %23 = vector.extract_strided_slice %6 {offsets = [6, 0], sizes = [2, 128], strides = [1, 1]} : vector<16x128xf32> to vector<2x128xf32>
    %cst_15 = arith.constant dense<0.000000e+00> : vector<2x128xf32>
    %24 = tpu.matmul %21, %1, %cst_15 {dimension_numbers = #tpu.dot_dimension_numbers<[1], [0], [0], [1], [0, 0, 1, 1], [], []>} : vector<2x128xf32>, vector<128x128xf32>, vector<2x128xf32> -> vector<2x128xf32>
    %25 = arith.addf %23, %24 : vector<2x128xf32>
    %26 = math.tanh %25 : vector<2x128xf32>
    %c6 = arith.constant 6 : index
    %c0_16 = arith.constant 0 : index
    %27 = vector.load %arg10[%c6, %c0_16] : memref<16x128xf32, #tpu.memory_space<vmem>>, vector<2x128xf32>
    tpu.vector_store %arg10[%c6, %c0_16], %26 {strides = array<i32>} : memref<16x128xf32, #tpu.memory_space<vmem>>, vector<2x128xf32>,
    %28 = vector.extract_strided_slice %6 {offsets = [8, 0], sizes = [2, 128], strides = [1, 1]} : vector<16x128xf32> to vector<2x128xf32>
    %cst_17 = arith.constant dense<0.000000e+00> : vector<2x128xf32>
    %29 = tpu.matmul %26, %1, %cst_17 {dimension_numbers = #tpu.dot_dimension_numbers<[1], [0], [0], [1], [0, 0, 1, 1], [], []>} : vector<2x128xf32>, vector<128x128xf32>, vector<2x128xf32> -> vector<2x128xf32>
    %30 = arith.addf %28, %29 : vector<2x128xf32>
    %31 = math.tanh %30 : vector<2x128xf32>
    %c8 = arith.constant 8 : index
    %c0_18 = arith.constant 0 : index
    %32 = vector.load %arg10[%c8, %c0_18] : memref<16x128xf32, #tpu.memory_space<vmem>>, vector<2x128xf32>
    tpu.vector_store %arg10[%c8, %c0_18], %31 {strides = array<i32>} : memref<16x128xf32, #tpu.memory_space<vmem>>, vector<2x128xf32>,
    %33 = vector.extract_strided_slice %6 {offsets = [10, 0], sizes = [2, 128], strides = [1, 1]} : vector<16x128xf32> to vector<2x128xf32>
    %cst_19 = arith.constant dense<0.000000e+00> : vector<2x128xf32>
    %34 = tpu.matmul %31, %1, %cst_19 {dimension_numbers = #tpu.dot_dimension_numbers<[1], [0], [0], [1], [0, 0, 1, 1], [], []>} : vector<2x128xf32>, vector<128x128xf32>, vector<2x128xf32> -> vector<2x128xf32>
    %35 = arith.addf %33, %34 : vector<2x128xf32>
    %36 = math.tanh %35 : vector<2x128xf32>
    %c10 = arith.constant 10 : index
    %c0_20 = arith.constant 0 : index
    %37 = vector.load %arg10[%c10, %c0_20] : memref<16x128xf32, #tpu.memory_space<vmem>>, vector<2x128xf32>
    tpu.vector_store %arg10[%c10, %c0_20], %36 {strides = array<i32>} : memref<16x128xf32, #tpu.memory_space<vmem>>, vector<2x128xf32>,
    %38 = vector.extract_strided_slice %6 {offsets = [12, 0], sizes = [2, 128], strides = [1, 1]} : vector<16x128xf32> to vector<2x128xf32>
    %cst_21 = arith.constant dense<0.000000e+00> : vector<2x128xf32>
    %39 = tpu.matmul %36, %1, %cst_21 {dimension_numbers = #tpu.dot_dimension_numbers<[1], [0], [0], [1], [0, 0, 1, 1], [], []>} : vector<2x128xf32>, vector<128x128xf32>, vector<2x128xf32> -> vector<2x128xf32>
    %40 = arith.addf %38, %39 : vector<2x128xf32>
    %41 = math.tanh %40 : vector<2x128xf32>
    %c12 = arith.constant 12 : index
    %c0_22 = arith.constant 0 : index
    %42 = vector.load %arg10[%c12, %c0_22] : memref<16x128xf32, #tpu.memory_space<vmem>>, vector<2x128xf32>
    tpu.vector_store %arg10[%c12, %c0_22], %41 {strides = array<i32>} : memref<16x128xf32, #tpu.memory_space<vmem>>, vector<2x128xf32>,
    %43 = vector.extract_strided_slice %6 {offsets = [14, 0], sizes = [2, 128], strides = [1, 1]} : vector<16x128xf32> to vector<2x128xf32>
    %cst_23 = arith.constant dense<0.000000e+00> : vector<2x128xf32>
    %44 = tpu.matmul %41, %1, %cst_23 {dimension_numbers = #tpu.dot_dimension_numbers<[1], [0], [0], [1], [0, 0, 1, 1], [], []>} : vector<2x128xf32>, vector<128x128xf32>, vector<2x128xf32> -> vector<2x128xf32>
    %45 = arith.addf %43, %44 : vector<2x128xf32>
    %46 = math.tanh %45 : vector<2x128xf32>
    %c14 = arith.constant 14 : index
    %c0_24 = arith.constant 0 : index
    %47 = vector.load %arg10[%c14, %c0_24] : memref<16x128xf32, #tpu.memory_space<vmem>>, vector<2x128xf32>
    tpu.vector_store %arg10[%c14, %c0_24], %46 {strides = array<i32>} : memref<16x128xf32, #tpu.memory_space<vmem>>, vector<2x128xf32>,
    %c0_25 = arith.constant 0 : index
    %c0_26 = arith.constant 0 : index
    %48 = vector.load %arg4[%c0_25, %c0_26] : memref<128x128xf32, #tpu.memory_space<vmem>>, vector<128x128xf32>
    %c0_27 = arith.constant 0 : index
    %c0_28 = arith.constant 0 : index
    %49 = vector.load %arg5[%c0_27, %c0_28] : memref<128x128xf32, #tpu.memory_space<vmem>>, vector<128x128xf32>
    %c0_29 = arith.constant 0 : index
    %c0_30 = arith.constant 0 : index
    %50 = vector.load %arg6[%c0_29, %c0_30] : memref<1x128xf32, #tpu.memory_space<vmem>>, vector<1x128xf32>
    %c0_31 = arith.constant 0 : index
    %c0_32 = arith.constant 0 : index
    %51 = vector.load %arg10[%c0_31, %c0_32] : memref<16x128xf32, #tpu.memory_space<vmem>>, vector<16x128xf32>
    %cst_33 = arith.constant dense<0.000000e+00> : vector<16x128xf32>
    %52 = tpu.matmul %51, %48, %cst_33 {dimension_numbers = #tpu.dot_dimension_numbers<[1], [0], [0], [1], [0, 0, 1, 1], [], []>} : vector<16x128xf32>, vector<128x128xf32>, vector<16x128xf32> -> vector<16x128xf32>
    %53 = vector.broadcast %50 : vector<1x128xf32> to vector<16x128xf32>
    %54 = arith.addf %52, %53 : vector<16x128xf32>
    %cst_34 = arith.constant 0.000000e+00 : f32
    %55 = vector.broadcast %cst_34 : f32 to vector<2x128xf32>
    %56 = vector.extract_strided_slice %54 {offsets = [0, 0], sizes = [2, 128], strides = [1, 1]} : vector<16x128xf32> to vector<2x128xf32>
    %cst_35 = arith.constant dense<0.000000e+00> : vector<2x128xf32>
    %57 = tpu.matmul %55, %49, %cst_35 {dimension_numbers = #tpu.dot_dimension_numbers<[1], [0], [0], [1], [0, 0, 1, 1], [], []>} : vector<2x128xf32>, vector<128x128xf32>, vector<2x128xf32> -> vector<2x128xf32>
    %58 = arith.addf %56, %57 : vector<2x128xf32>
    %59 = math.tanh %58 : vector<2x128xf32>
    %60 = vector.extract_strided_slice %54 {offsets = [2, 0], sizes = [2, 128], strides = [1, 1]} : vector<16x128xf32> to vector<2x128xf32>
    %cst_36 = arith.constant dense<0.000000e+00> : vector<2x128xf32>
    %61 = tpu.matmul %59, %49, %cst_36 {dimension_numbers = #tpu.dot_dimension_numbers<[1], [0], [0], [1], [0, 0, 1, 1], [], []>} : vector<2x128xf32>, vector<128x128xf32>, vector<2x128xf32> -> vector<2x128xf32>
    %62 = arith.addf %60, %61 : vector<2x128xf32>
    %63 = math.tanh %62 : vector<2x128xf32>
    %64 = vector.extract_strided_slice %54 {offsets = [4, 0], sizes = [2, 128], strides = [1, 1]} : vector<16x128xf32> to vector<2x128xf32>
    %cst_37 = arith.constant dense<0.000000e+00> : vector<2x128xf32>
    %65 = tpu.matmul %63, %49, %cst_37 {dimension_numbers = #tpu.dot_dimension_numbers<[1], [0], [0], [1], [0, 0, 1, 1], [], []>} : vector<2x128xf32>, vector<128x128xf32>, vector<2x128xf32> -> vector<2x128xf32>
    %66 = arith.addf %64, %65 : vector<2x128xf32>
    %67 = math.tanh %66 : vector<2x128xf32>
    %68 = vector.extract_strided_slice %54 {offsets = [6, 0], sizes = [2, 128], strides = [1, 1]} : vector<16x128xf32> to vector<2x128xf32>
    %cst_38 = arith.constant dense<0.000000e+00> : vector<2x128xf32>
    %69 = tpu.matmul %67, %49, %cst_38 {dimension_numbers = #tpu.dot_dimension_numbers<[1], [0], [0], [1], [0, 0, 1, 1], [], []>} : vector<2x128xf32>, vector<128x128xf32>, vector<2x128xf32> -> vector<2x128xf32>
    %70 = arith.addf %68, %69 : vector<2x128xf32>
    %71 = math.tanh %70 : vector<2x128xf32>
    %72 = vector.extract_strided_slice %54 {offsets = [8, 0], sizes = [2, 128], strides = [1, 1]} : vector<16x128xf32> to vector<2x128xf32>
    %cst_39 = arith.constant dense<0.000000e+00> : vector<2x128xf32>
    %73 = tpu.matmul %71, %49, %cst_39 {dimension_numbers = #tpu.dot_dimension_numbers<[1], [0], [0], [1], [0, 0, 1, 1], [], []>} : vector<2x128xf32>, vector<128x128xf32>, vector<2x128xf32> -> vector<2x128xf32>
    %74 = arith.addf %72, %73 : vector<2x128xf32>
    %75 = math.tanh %74 : vector<2x128xf32>
    %76 = vector.extract_strided_slice %54 {offsets = [10, 0], sizes = [2, 128], strides = [1, 1]} : vector<16x128xf32> to vector<2x128xf32>
    %cst_40 = arith.constant dense<0.000000e+00> : vector<2x128xf32>
    %77 = tpu.matmul %75, %49, %cst_40 {dimension_numbers = #tpu.dot_dimension_numbers<[1], [0], [0], [1], [0, 0, 1, 1], [], []>} : vector<2x128xf32>, vector<128x128xf32>, vector<2x128xf32> -> vector<2x128xf32>
    %78 = arith.addf %76, %77 : vector<2x128xf32>
    %79 = math.tanh %78 : vector<2x128xf32>
    %80 = vector.extract_strided_slice %54 {offsets = [12, 0], sizes = [2, 128], strides = [1, 1]} : vector<16x128xf32> to vector<2x128xf32>
    %cst_41 = arith.constant dense<0.000000e+00> : vector<2x128xf32>
    %81 = tpu.matmul %79, %49, %cst_41 {dimension_numbers = #tpu.dot_dimension_numbers<[1], [0], [0], [1], [0, 0, 1, 1], [], []>} : vector<2x128xf32>, vector<128x128xf32>, vector<2x128xf32> -> vector<2x128xf32>
    %82 = arith.addf %80, %81 : vector<2x128xf32>
    %83 = math.tanh %82 : vector<2x128xf32>
    %84 = vector.extract_strided_slice %54 {offsets = [14, 0], sizes = [2, 128], strides = [1, 1]} : vector<16x128xf32> to vector<2x128xf32>
    %cst_42 = arith.constant dense<0.000000e+00> : vector<2x128xf32>
    %85 = tpu.matmul %83, %49, %cst_42 {dimension_numbers = #tpu.dot_dimension_numbers<[1], [0], [0], [1], [0, 0, 1, 1], [], []>} : vector<2x128xf32>, vector<128x128xf32>, vector<2x128xf32> -> vector<2x128xf32>
    %86 = arith.addf %84, %85 : vector<2x128xf32>
    %87 = math.tanh %86 : vector<2x128xf32>
    %c0_43 = arith.constant 0 : index
    %c0_44 = arith.constant 0 : index
    %88 = vector.load %arg7[%c0_43, %c0_44] : memref<128x128xf32, #tpu.memory_space<vmem>>, vector<128x128xf32>
    %cst_45 = arith.constant dense<0.000000e+00> : vector<2x128xf32>
    %89 = tpu.matmul %87, %88, %cst_45 {dimension_numbers = #tpu.dot_dimension_numbers<[1], [0], [0], [1], [0, 0, 1, 1], [], []>} : vector<2x128xf32>, vector<128x128xf32>, vector<2x128xf32> -> vector<2x128xf32>
    %c0_46 = arith.constant 0 : index
    %c0_47 = arith.constant 0 : index
    %90 = vector.load %arg8[%c0_46, %c0_47] : memref<1x128xf32, #tpu.memory_space<vmem>>, vector<1x128xf32>
    %91 = vector.broadcast %90 : vector<1x128xf32> to vector<2x128xf32>
    %92 = arith.addf %89, %91 : vector<2x128xf32>
    %c0_48 = arith.constant 0 : index
    %c0_49 = arith.constant 0 : index
    %93 = vector.load %arg9[%c0_48, %c0_49] : memref<2x128xf32, #tpu.memory_space<vmem>>, vector<2x128xf32>
    tpu.vector_store %arg9[%c0_48, %c0_49], %92 {strides = array<i32>} : memref<2x128xf32, #tpu.memory_space<vmem>>, vector<2x128xf32>,
    return
  }
}

</mosaic_0001>

<llo_original>
// kernel: tpu_custom_call.1
$region0: #{tpu_custom_call.1}
  #allocation0 [shape = 'u32[]', space=smem, size = 0x4, offset = 0x4, fixed_abs, tag = 'smem constant byte address 0x4 - core index']
  #allocation1 [shape = 'u32[144,128]{1,0:T(1,128)}', space=vmem, size = 0x12000, scoped, tag = 'internal scratch']
  #allocation2 [shape = 'f32[16,128]{1,0:T(8,128)}', space=vmem, size = 0x2000, scoped, tag = 'scratch operand']
  %s0 = inlined_call_operand.vmem [shape: f32[16,4], index: 0, kind: input, shape index: {}]
  %s1 = inlined_call_operand.vmem [shape: f32[4,128], index: 1, kind: input, shape index: {}]
  %s2 = inlined_call_operand.hbm [shape: f32[128,128], index: 2, kind: input, shape index: {}]
  %s3 = inlined_call_operand.vmem [shape: f32[1,128], index: 3, kind: input, shape index: {}]
  %s4 = inlined_call_operand.hbm [shape: f32[128,128], index: 4, kind: input, shape index: {}]
  %s5 = inlined_call_operand.hbm [shape: f32[128,128], index: 5, kind: input, shape index: {}]
  %s6 = inlined_call_operand.vmem [shape: f32[1,128], index: 6, kind: input, shape index: {}]
  %s7 = inlined_call_operand.hbm [shape: f32[128,128], index: 7, kind: input, shape index: {}]
  %s8 = inlined_call_operand.vmem [shape: f32[1,128], index: 8, kind: input, shape index: {}]
  %s9 = inlined_call_operand.hbm [shape: f32[2,128], index: 9, kind: output, shape index: {}]
  %s10 = sld [smem:[#allocation0]]
  $region62: #{tpu_custom_call.1} parent=0
    _
  %s12 = ssub.s32 1, %s10
  %s13 = scalar_select 0, %s12, %s10
  $region1: #{tpu_custom_call.1} parent=0
    #allocation3 [shape = 'u8[65536]{0}', space=vmem, size = 0x10000, scoped, tag = 'input window, operand 2, single buffered']
    #allocation4 [shape = 's32[1]{0}', space=sflag, size = 0x4, scoped, tag = 'scoped memory for tpu_custom_call.1']
    #allocation5 [shape = 's32[1]{0}', space=sflag, size = 0x4, scoped, tag = 'scoped memory for tpu_custom_call.1']
    #allocation6 [shape = 'u8[65536]{0}', space=vmem, size = 0x10000, scoped, tag = 'input window, operand 4, single buffered']
    #allocation7 [shape = 's32[1]{0}', space=sflag, size = 0x4, scoped, tag = 'scoped memory for tpu_custom_call.1']
    #allocation8 [shape = 'u8[65536]{0}', space=vmem, size = 0x10000, scoped, tag = 'input window, operand 5, single buffered']
    #allocation9 [shape = 'u8[65536]{0}', space=vmem, size = 0x10000, scoped, tag = 'input window, operand 7, single buffered']
    #allocation10 [shape = 's32[1]{0}', space=sflag, size = 0x4, scoped, tag = 'scoped memory for tpu_custom_call.1']
    #allocation11 [shape = 'u8[1024]{0}', space=vmem, size = 0x400, scoped, tag = 'output window, operand 0, single buffered']
    %14 = vsyncpa [#allocation4], 0
    %15 = vsyncpa [#allocation7], 0
    %16 = vsyncpa [#allocation10], 0
    %17 = vsyncpa [#allocation5], 0
    // Predicated region
    $region2: #{tpu_custom_call.1} parent=1 // pred_check
      _
    $region3: #{tpu_custom_call.1} parent=1 // pred_check_branch
      %19 = sbr.rel (0) target = $region5
    $region4: #{tpu_custom_call.1} parent=1 // pred_region
      _
    $region5: #{tpu_custom_call.1} parent=1 // pred_fallthru
      _
    // Predicated region
    $region6: #{tpu_custom_call.1} parent=1 // pred_check
      _
    $region7: #{tpu_custom_call.1} parent=1 // pred_check_branch
      %21 = sbr.rel (0) target = $region9
    $region8: #{tpu_custom_call.1} parent=1 // pred_region
      _
    $region9: #{tpu_custom_call.1} parent=1 // pred_fallthru
      _
    // Predicated region
    $region10: #{tpu_custom_call.1} parent=1 // pred_check
      _
    $region11: #{tpu_custom_call.1} parent=1 // pred_check_branch
      %23 = sbr.rel (0) target = $region13
    $region12: #{tpu_custom_call.1} parent=1 // pred_region
      %s25 = ssub.s32 2048, 2048
      %26 = vsyncadd [#allocation4], %s25
      %s27 = sshll.u32 [#allocation3], 4
      %s28 = int_to_ptr.vmem [resolvable:$true] %s27
      %33 = dma.hbm_to_vmem [thread:$0]  %s2, 2048, %s28, [#allocation4], 128, 128, 8
    $region13: #{tpu_custom_call.1} parent=1 // pred_fallthru
      _
    // Predicated region
    $region14: #{tpu_custom_call.1} parent=1 // pred_check
      _
    $region15: #{tpu_custom_call.1} parent=1 // pred_check_branch
      %35 = sbr.rel (0) target = $region17
    $region16: #{tpu_custom_call.1} parent=1 // pred_region
      _
    $region17: #{tpu_custom_call.1} parent=1 // pred_fallthru
      _
    // Predicated region
    $region18: #{tpu_custom_call.1} parent=1 // pred_check
      _
    $region19: #{tpu_custom_call.1} parent=1 // pred_check_branch
      %37 = sbr.rel (0) target = $region21
    $region20: #{tpu_custom_call.1} parent=1 // pred_region
      %s39 = ssub.s32 2048, 2048
      %40 = vsyncadd [#allocation7], %s39
      %s41 = sshll.u32 [#allocation6], 4
      %s42 = int_to_ptr.vmem [resolvable:$true] %s41
      %47 = dma.hbm_to_vmem [thread:$0]  %s4, 2048, %s42, [#allocation7], 128, 128, 8
    $region21: #{tpu_custom_call.1} parent=1 // pred_fallthru
      _
    // Predicated region
    $region22: #{tpu_custom_call.1} parent=1 // pred_check
      _
    $region23: #{tpu_custom_call.1} parent=1 // pred_check_branch
      %49 = sbr.rel (0) target = $region25
    $region24: #{tpu_custom_call.1} parent=1 // pred_region
      %s51 = ssub.s32 2048, 2048
      %52 = vsyncadd [#allocation7], %s51
      %s53 = sshll.u32 [#allocation8], 4
      %s54 = int_to_ptr.vmem [resolvable:$true] %s53
      %59 = dma.hbm_to_vmem [thread:$0]  %s5, 2048, %s54, [#allocation7], 128, 128, 8
    $region25: #{tpu_custom_call.1} parent=1 // pred_fallthru
      _
    // Predicated region
    $region26: #{tpu_custom_call.1} parent=1 // pred_check
      _
    $region27: #{tpu_custom_call.1} parent=1 // pred_check_branch
      %61 = sbr.rel (0) target = $region29
    $region28: #{tpu_custom_call.1} parent=1 // pred_region
      _
    $region29: #{tpu_custom_call.1} parent=1 // pred_fallthru
      _
    // Predicated region
    $region30: #{tpu_custom_call.1} parent=1 // pred_check
      _
    $region31: #{tpu_custom_call.1} parent=1 // pred_check_branch
      %63 = sbr.rel (0) target = $region33
    $region32: #{tpu_custom_call.1} parent=1 // pred_region
      %s65 = ssub.s32 2048, 2048
      %66 = vsyncadd [#allocation10], %s65
      %s67 = sshll.u32 [#allocation9], 4
      %s68 = int_to_ptr.vmem [resolvable:$true] %s67
      %73 = dma.hbm_to_vmem [thread:$0]  %s7, 2048, %s68, [#allocation10], 128, 128, 8
    $region33: #{tpu_custom_call.1} parent=1 // pred_fallthru
      _
    // Predicated region
    $region34: #{tpu_custom_call.1} parent=1 // pred_check
      _
    $region35: #{tpu_custom_call.1} parent=1 // pred_check_branch
      %75 = sbr.rel (0) target = $region37
    $region36: #{tpu_custom_call.1} parent=1 // pred_region
      _
    $region37: #{tpu_custom_call.1} parent=1 // pred_fallthru
      _
    // Predicated region
    $region38: #{tpu_custom_call.1} parent=1 // pred_check
      _
    $region39: #{tpu_custom_call.1} parent=1 // pred_check_branch
      %77 = sbr.rel (0) target = $region41
    $region40: #{tpu_custom_call.1} parent=1 // pred_region
      %78 = dma.done [#allocation4], 2048
    $region41: #{tpu_custom_call.1} parent=1 // pred_fallthru
      _
    // Predicated region
    $region42: #{tpu_custom_call.1} parent=1 // pred_check
      _
    $region43: #{tpu_custom_call.1} parent=1 // pred_check_branch
      %80 = sbr.rel (0) target = $region45
    $region44: #{tpu_custom_call.1} parent=1 // pred_region
      %81 = dma.done [#allocation7], 2048
    $region45: #{tpu_custom_call.1} parent=1 // pred_fallthru
      _
    // Predicated region
    $region46: #{tpu_custom_call.1} parent=1 // pred_check
      _
    $region47: #{tpu_custom_call.1} parent=1 // pred_check_branch
      %83 = sbr.rel (0) target = $region49
    $region48: #{tpu_custom_call.1} parent=1 // pred_region
      %84 = dma.done [#allocation7], 2048
    $region49: #{tpu_custom_call.1} parent=1 // pred_fallthru
      _
    // Predicated region
    $region50: #{tpu_custom_call.1} parent=1 // pred_check
      _
    $region51: #{tpu_custom_call.1} parent=1 // pred_check_branch
      %86 = sbr.rel (0) target = $region53
    $region52: #{tpu_custom_call.1} parent=1 // pred_region
      %87 = dma.done [#allocation10], 2048
    $region53: #{tpu_custom_call.1} parent=1 // pred_fallthru
      _
    %v88 = vld [vmem:[%s1] sm:$0xf]
    %v89 = vld [vmem:[#allocation3] sm:$0xff]
    %v90 = vld [vmem:[#allocation3 + $0x8] sm:$0xff]
    %v91 = vld [vmem:[#allocation3 + $0x10] sm:$0xff]
    %v92 = vld [vmem:[#allocation3 + $0x18] sm:$0xff]
    %v93 = vld [vmem:[#allocation3 + $0x20] sm:$0xff]
    %v94 = vld [vmem:[#allocation3 + $0x28] sm:$0xff]
    %v95 = vld [vmem:[#allocation3 + $0x30] sm:$0xff]
    %v96 = vld [vmem:[#allocation3 + $0x38] sm:$0xff]
    %v97 = vld [vmem:[#allocation3 + $0x40] sm:$0xff]
    %v98 = vld [vmem:[#allocation3 + $0x48] sm:$0xff]
    %v99 = vld [vmem:[#allocation3 + $0x50] sm:$0xff]
    %v100 = vld [vmem:[#allocation3 + $0x58] sm:$0xff]
    %v101 = vld [vmem:[#allocation3 + $0x60] sm:$0xff]
    %v102 = vld [vmem:[#allocation3 + $0x68] sm:$0xff]
    %v103 = vld [vmem:[#allocation3 + $0x70] sm:$0xff]
    %v104 = vld [vmem:[#allocation3 + $0x78] sm:$0xff]
    %v105 = vld [vmem:[%s3] sm:$0x1]
    %v106 = vld [vmem:[%s0] sm:$0xff]
    %v107 = vld [vmem:[%s0 + $0x8] sm:$0xff]
    %v109 = vlaneseq
    %v110 = vshrl.u32 %v109, 7
    %v111 = vsub.s32 0, %v110
    %v112 = vrot.slane %v105, %v111
    %vm114 = vcmask 31744
    %v116 = vsel %vm114, %v106, 0
    %v119 = vsel %vm114, %v107, 0
    %vm121 = vcmask 1043456
    %v123 = vsel %vm121, %v88, 0
    %125 = vmatprep.subr.mxu0 0.0
    %126 = vmatpush1.msra.mxu0 0.0
    %127 = vmatprep.subr.mxu0 0.0
    %128 = vmatpush1.msra.mxu0 0.0
    %129 = vmatprep.subr.mxu0 0.0
    %130 = vmatpush1.msra.mxu0 0.0
    %131 = vmatprep.subr.mxu0 0.0
    %132 = vmatpush1.msra.mxu0 0.0
    %133 = vmatprep.subr.mxu0 0.0
    %134 = vmatpush1.msra.mxu0 0.0
    %135 = vmatprep.subr.mxu0 0.0
    %136 = vmatpush1.msra.mxu0 0.0
    %137 = vmatprep.subr.mxu0 0.0
    %138 = vmatpush1.msra.mxu0 0.0
    %139 = vmatprep.subr.mxu0 0.0
    %140 = vmatpush1.msra.mxu0 0.0
    %141 = vmatprep.subr.mxu0 0.0
    %142 = vmatpush1.msra.mxu0 0.0
    %143 = vmatprep.subr.mxu0 0.0
    %144 = vmatpush1.msra.mxu0 0.0
    %145 = vmatprep.subr.mxu0 0.0
    %146 = vmatpush1.msra.mxu0 0.0
    %147 = vmatprep.subr.mxu0 0.0
    %148 = vmatpush1.msra.mxu0 0.0
    %149 = vmatprep.subr.mxu0 0.0
    %150 = vmatpush1.msra.mxu0 0.0
    %151 = vmatprep.subr.mxu0 0.0
    %152 = vmatpush1.msra.mxu0 0.0
    %153 = vmatprep.subr.mxu0 0.0
    %154 = vmatpush1.msra.mxu0 0.0
    %155 = vmatprep.subr.mxu0 0.0
    %156 = vmatpush1.msra.mxu0 %v123
    %157 = vmatprep.subr.mxu0 0.0
    %158 = vmatpush2.msra.mxu0 0.0
    %159 = vmatprep.subr.mxu0 0.0
    %160 = vmatpush2.msra.mxu0 0.0
    %161 = vmatprep.subr.mxu0 0.0
    %162 = vmatpush2.msra.mxu0 0.0
    %163 = vmatprep.subr.mxu0 0.0
    %164 = vmatpush2.msra.mxu0 0.0
    %165 = vmatprep.subr.mxu0 0.0
    %166 = vmatpush2.msra.mxu0 0.0
    %167 = vmatprep.subr.mxu0 0.0
    %168 = vmatpush2.msra.mxu0 0.0
    %169 = vmatprep.subr.mxu0 0.0
    %170 = vmatpush2.msra.mxu0 0.0
    %171 = vmatprep.subr.mxu0 0.0
    %172 = vmatpush2.msra.mxu0 0.0
    %173 = vmatprep.subr.mxu0 0.0
    %174 = vmatpush2.msra.mxu0 0.0
    %175 = vmatprep.subr.mxu0 0.0
    %176 = vmatpush2.msra.mxu0 0.0
    %177 = vmatprep.subr.mxu0 0.0
    %178 = vmatpush2.msra.mxu0 0.0
    %179 = vmatprep.subr.mxu0 0.0
    %180 = vmatpush2.msra.mxu0 0.0
    %181 = vmatprep.subr.mxu0 0.0
    %182 = vmatpush2.msra.mxu0 0.0
    %183 = vmatprep.subr.mxu0 0.0
    %184 = vmatpush2.msra.mxu0 0.0
    %185 = vmatprep.subr.mxu0 0.0
    %186 = vmatpush2.msra.mxu0 0.0
    %187 = vmatprep.subr.mxu0 0.0
    %188 = vmatpush2.msra.mxu0 0.0
    %189 = vmatprep.mubr.f32.mxu0 0.0
    %190 = vmatmul.mubr.f32.gmra.mxu0 %v116
    %v191 = vpop.f32.mrf.mxu0
    %v192 = vadd.f32 %v112, %v191
    %v193 = vpop.f32.mrf.mxu0
    %194 = vmatprep.mubr.f32.mxu0 0.0
    %195 = vmatmul.mubr.f32.gmra.mxu0 %v119
    %v196 = vpop.f32.mrf.mxu0
    %v197 = vadd.f32 %v112, %v196
    %v198 = vpop.f32.mrf.mxu0
    %199 = vdwg.mxu0
    %200 = vmatprep.subr.mxu0 0.0
    %201 = vmatpush1.msra.mxu0 %v104
    %202 = vmatprep.subr.mxu0 0.0
    %203 = vmatpush1.msra.mxu0 %v103
    %204 = vmatprep.subr.mxu0 0.0
    %205 = vmatpush1.msra.mxu0 %v102
    %206 = vmatprep.subr.mxu0 0.0
    %207 = vmatpush1.msra.mxu0 %v101
    %208 = vmatprep.subr.mxu0 0.0
    %209 = vmatpush1.msra.mxu0 %v100
    %210 = vmatprep.subr.mxu0 0.0
    %211 = vmatpush1.msra.mxu0 %v99
    %212 = vmatprep.subr.mxu0 0.0
    %213 = vmatpush1.msra.mxu0 %v98
    %214 = vmatprep.subr.mxu0 0.0
    %215 = vmatpush1.msra.mxu0 %v97
    %216 = vmatprep.subr.mxu0 0.0
    %217 = vmatpush1.msra.mxu0 %v96
    %218 = vmatprep.subr.mxu0 0.0
    %219 = vmatpush1.msra.mxu0 %v95
    %220 = vmatprep.subr.mxu0 0.0
    %221 = vmatpush1.msra.mxu0 %v94
    %222 = vmatprep.subr.mxu0 0.0
    %223 = vmatpush1.msra.mxu0 %v93
    %224 = vmatprep.subr.mxu0 0.0
    %225 = vmatpush1.msra.mxu0 %v92
    %226 = vmatprep.subr.mxu0 0.0
    %227 = vmatpush1.msra.mxu0 %v91
    %228 = vmatprep.subr.mxu0 0.0
    %229 = vmatpush1.msra.mxu0 %v90
    %230 = vmatprep.subr.mxu0 0.0
    %231 = vmatpush1.msra.mxu0 %v89
    %232 = vmatprep.subr.mxu0 0.0
    %233 = vmatpush2.msra.mxu0 0.0
    %234 = vmatprep.subr.mxu0 0.0
    %235 = vmatpush2.msra.mxu0 0.0
    %236 = vmatprep.subr.mxu0 0.0
    %237 = vmatpush2.msra.mxu0 0.0
    %238 = vmatprep.subr.mxu0 0.0
    %239 = vmatpush2.msra.mxu0 0.0
    %240 = vmatprep.subr.mxu0 0.0
    %241 = vmatpush2.msra.mxu0 0.0
    %242 = vmatprep.subr.mxu0 0.0
    %243 = vmatpush2.msra.mxu0 0.0
    %244 = vmatprep.subr.mxu0 0.0
    %245 = vmatpush2.msra.mxu0 0.0
    %246 = vmatprep.subr.mxu0 0.0
    %247 = vmatpush2.msra.mxu0 0.0
    %248 = vmatprep.subr.mxu0 0.0
    %249 = vmatpush2.msra.mxu0 0.0
    %250 = vmatprep.subr.mxu0 0.0
    %251 = vmatpush2.msra.mxu0 0.0
    %252 = vmatprep.subr.mxu0 0.0
    %253 = vmatpush2.msra.mxu0 0.0
    %254 = vmatprep.subr.mxu0 0.0
    %255 = vmatpush2.msra.mxu0 0.0
    %256 = vmatprep.subr.mxu0 0.0
    %257 = vmatpush2.msra.mxu0 0.0
    %258 = vmatprep.subr.mxu0 0.0
    %259 = vmatpush2.msra.mxu0 0.0
    %260 = vmatprep.subr.mxu0 0.0
    %261 = vmatpush2.msra.mxu0 0.0
    %262 = vmatprep.subr.mxu0 0.0
    %263 = vmatpush2.msra.mxu0 0.0
    %264 = vmatprep.mubr.f32.mxu0 0.0
    %265 = vmatmul.mubr.f32.gmra.mxu0 0.0
    %v266 = vpop.f32.mrf.mxu0
    %v267 = vadd.f32 0.0, %v266
    %v268 = vpop.f32.mrf.mxu0
    %269 = vdwg.mxu0
    %v270 = vadd.f32 %v192, %v267
    %v271 = vtanh.pop %v270
    %272 = vst [vmem:[#allocation2] sm:$0x3] %v271
    %273 = vmatprep.subr.mxu0 0.0
    %274 = vmatpush1.msra.mxu0 %v104
    %275 = vmatprep.subr.mxu0 0.0
    %276 = vmatpush1.msra.mxu0 %v103
    %277 = vmatprep.subr.mxu0 0.0
    %278 = vmatpush1.msra.mxu0 %v102
    %279 = vmatprep.subr.mxu0 0.0
    %280 = vmatpush1.msra.mxu0 %v101
    %281 = vmatprep.subr.mxu0 0.0
    %282 = vmatpush1.msra.mxu0 %v100
    %283 = vmatprep.subr.mxu0 0.0
    %284 = vmatpush1.msra.mxu0 %v99
    %285 = vmatprep.subr.mxu0 0.0
    %286 = vmatpush1.msra.mxu0 %v98
    %287 = vmatprep.subr.mxu0 0.0
    %288 = vmatpush1.msra.mxu0 %v97
    %289 = vmatprep.subr.mxu0 0.0
    %290 = vmatpush1.msra.mxu0 %v96
    %291 = vmatprep.subr.mxu0 0.0
    %292 = vmatpush1.msra.mxu0 %v95
    %293 = vmatprep.subr.mxu0 0.0
    %294 = vmatpush1.msra.mxu0 %v94
    %295 = vmatprep.subr.mxu0 0.0
    %296 = vmatpush1.msra.mxu0 %v93
    %297 = vmatprep.subr.mxu0 0.0
    %298 = vmatpush1.msra.mxu0 %v92
    %299 = vmatprep.subr.mxu0 0.0
    %300 = vmatpush1.msra.mxu0 %v91
    %301 = vmatprep.subr.mxu0 0.0
    %302 = vmatpush1.msra.mxu0 %v90
    %303 = vmatprep.subr.mxu0 0.0
    %304 = vmatpush1.msra.mxu0 %v89
    %305 = vmatprep.subr.mxu0 0.0
    %306 = vmatpush2.msra.mxu0 0.0
    %307 = vmatprep.subr.mxu0 0.0
    %308 = vmatpush2.msra.mxu0 0.0
    %309 = vmatprep.subr.mxu0 0.0
    %310 = vmatpush2.msra.mxu0 0.0
    %311 = vmatprep.subr.mxu0 0.0
    %312 = vmatpush2.msra.mxu0 0.0
    %313 = vmatprep.subr.mxu0 0.0
    %314 = vmatpush2.msra.mxu0 0.0
    %315 = vmatprep.subr.mxu0 0.0
    %316 = vmatpush2.msra.mxu0 0.0
    %317 = vmatprep.subr.mxu0 0.0
    %318 = vmatpush2.msra.mxu0 0.0
    %319 = vmatprep.subr.mxu0 0.0
    %320 = vmatpush2.msra.mxu0 0.0
    %321 = vmatprep.subr.mxu0 0.0
    %322 = vmatpush2.msra.mxu0 0.0
    %323 = vmatprep.subr.mxu0 0.0
    %324 = vmatpush2.msra.mxu0 0.0
    %325 = vmatprep.subr.mxu0 0.0
    %326 = vmatpush2.msra.mxu0 0.0
    %327 = vmatprep.subr.mxu0 0.0
    %328 = vmatpush2.msra.mxu0 0.0
    %329 = vmatprep.subr.mxu0 0.0
    %330 = vmatpush2.msra.mxu0 0.0
    %331 = vmatprep.subr.mxu0 0.0
    %332 = vmatpush2.msra.mxu0 0.0
    %333 = vmatprep.subr.mxu0 0.0
    %334 = vmatpush2.msra.mxu0 0.0
    %335 = vmatprep.subr.mxu0 0.0
    %336 = vmatpush2.msra.mxu0 0.0
    %337 = vmatprep.mubr.f32.mxu0 0.0
    %338 = vmatmul.mubr.f32.gmra.mxu0 %v271
    %v339 = vpop.f32.mrf.mxu0
    %v340 = vadd.f32 0.0, %v339
    %v341 = vpop.f32.mrf.mxu0
    %342 = vdwg.mxu0
    %v344 = vrot.slane %v340, 6
    %v346 = vadd.f32 %v192, %v344
    %v347 = vtanh.pop %v346
    %348 = vst [vmem:[#allocation2] sm:$0xc] %v347
    %v350 = vrot.slane %v347, 2
    %352 = vmatprep.subr.mxu0 0.0
    %353 = vmatpush1.msra.mxu0 %v104
    %354 = vmatprep.subr.mxu0 0.0
    %355 = vmatpush1.msra.mxu0 %v103
    %356 = vmatprep.subr.mxu0 0.0
    %357 = vmatpush1.msra.mxu0 %v102
    %358 = vmatprep.subr.mxu0 0.0
    %359 = vmatpush1.msra.mxu0 %v101
    %360 = vmatprep.subr.mxu0 0.0
    %361 = vmatpush1.msra.mxu0 %v100
    %362 = vmatprep.subr.mxu0 0.0
    %363 = vmatpush1.msra.mxu0 %v99
    %364 = vmatprep.subr.mxu0 0.0
    %365 = vmatpush1.msra.mxu0 %v98
    %366 = vmatprep.subr.mxu0 0.0
    %367 = vmatpush1.msra.mxu0 %v97
    %368 = vmatprep.subr.mxu0 0.0
    %369 = vmatpush1.msra.mxu0 %v96
    %370 = vmatprep.subr.mxu0 0.0
    %371 = vmatpush1.msra.mxu0 %v95
    %372 = vmatprep.subr.mxu0 0.0
    %373 = vmatpush1.msra.mxu0 %v94
    %374 = vmatprep.subr.mxu0 0.0
    %375 = vmatpush1.msra.mxu0 %v93
    %376 = vmatprep.subr.mxu0 0.0
    %377 = vmatpush1.msra.mxu0 %v92
    %378 = vmatprep.subr.mxu0 0.0
    %379 = vmatpush1.msra.mxu0 %v91
    %380 = vmatprep.subr.mxu0 0.0
    %381 = vmatpush1.msra.mxu0 %v90
    %382 = vmatprep.subr.mxu0 0.0
    %383 = vmatpush1.msra.mxu0 %v89
    %384 = vmatprep.subr.mxu0 0.0
    %385 = vmatpush2.msra.mxu0 0.0
    %386 = vmatprep.subr.mxu0 0.0
    %387 = vmatpush2.msra.mxu0 0.0
    %388 = vmatprep.subr.mxu0 0.0
    %389 = vmatpush2.msra.mxu0 0.0
    %390 = vmatprep.subr.mxu0 0.0
    %391 = vmatpush2.msra.mxu0 0.0
    %392 = vmatprep.subr.mxu0 0.0
    %393 = vmatpush2.msra.mxu0 0.0
    %394 = vmatprep.subr.mxu0 0.0
    %395 = vmatpush2.msra.mxu0 0.0
    %396 = vmatprep.subr.mxu0 0.0
    %397 = vmatpush2.msra.mxu0 0.0
    %398 = vmatprep.subr.mxu0 0.0
    %399 = vmatpush2.msra.mxu0 0.0
    %400 = vmatprep.subr.mxu0 0.0
    %401 = vmatpush2.msra.mxu0 0.0
    %402 = vmatprep.subr.mxu0 0.0
    %403 = vmatpush2.msra.mxu0 0.0
    %404 = vmatprep.subr.mxu0 0.0
    %405 = vmatpush2.msra.mxu0 0.0
    %406 = vmatprep.subr.mxu0 0.0
    %407 = vmatpush2.msra.mxu0 0.0
    %408 = vmatprep.subr.mxu0 0.0
    %409 = vmatpush2.msra.mxu0 0.0
    %410 = vmatprep.subr.mxu0 0.0
    %411 = vmatpush2.msra.mxu0 0.0
    %412 = vmatprep.subr.mxu0 0.0
    %413 = vmatpush2.msra.mxu0 0.0
    %414 = vmatprep.subr.mxu0 0.0
    %415 = vmatpush2.msra.mxu0 0.0
    %416 = vmatprep.mubr.f32.mxu0 0.0
    %417 = vmatmul.mubr.f32.gmra.mxu0 %v350
    %v418 = vpop.f32.mrf.mxu0
    %v419 = vadd.f32 0.0, %v418
    %v420 = vpop.f32.mrf.mxu0
    %421 = vdwg.mxu0
    %v423 = vrot.slane %v419, 4
    %v425 = vadd.f32 %v192, %v423
    %v426 = vtanh.pop %v425
    %427 = vst [vmem:[#allocation2] sm:$0x30] %v426
    %v429 = vrot.slane %v426, 4
    %431 = vmatprep.subr.mxu0 0.0
    %432 = vmatpush1.msra.mxu0 %v104
    %433 = vmatprep.subr.mxu0 0.0
    %434 = vmatpush1.msra.mxu0 %v103
    %435 = vmatprep.subr.mxu0 0.0
    %436 = vmatpush1.msra.mxu0 %v102
    %437 = vmatprep.subr.mxu0 0.0
    %438 = vmatpush1.msra.mxu0 %v101
    %439 = vmatprep.subr.mxu0 0.0
    %440 = vmatpush1.msra.mxu0 %v100
    %441 = vmatprep.subr.mxu0 0.0
    %442 = vmatpush1.msra.mxu0 %v99
    %443 = vmatprep.subr.mxu0 0.0
    %444 = vmatpush1.msra.mxu0 %v98
    %445 = vmatprep.subr.mxu0 0.0
    %446 = vmatpush1.msra.mxu0 %v97
    %447 = vmatprep.subr.mxu0 0.0
    %448 = vmatpush1.msra.mxu0 %v96
    %449 = vmatprep.subr.mxu0 0.0
    %450 = vmatpush1.msra.mxu0 %v95
    %451 = vmatprep.subr.mxu0 0.0
    %452 = vmatpush1.msra.mxu0 %v94
    %453 = vmatprep.subr.mxu0 0.0
    %454 = vmatpush1.msra.mxu0 %v93
    %455 = vmatprep.subr.mxu0 0.0
    %456 = vmatpush1.msra.mxu0 %v92
    %457 = vmatprep.subr.mxu0 0.0
    %458 = vmatpush1.msra.mxu0 %v91
    %459 = vmatprep.subr.mxu0 0.0
    %460 = vmatpush1.msra.mxu0 %v90
    %461 = vmatprep.subr.mxu0 0.0
    %462 = vmatpush1.msra.mxu0 %v89
    %463 = vmatprep.subr.mxu0 0.0
    %464 = vmatpush2.msra.mxu0 0.0
    %465 = vmatprep.subr.mxu0 0.0
    %466 = vmatpush2.msra.mxu0 0.0
    %467 = vmatprep.subr.mxu0 0.0
    %468 = vmatpush2.msra.mxu0 0.0
    %469 = vmatprep.subr.mxu0 0.0
    %470 = vmatpush2.msra.mxu0 0.0
    %471 = vmatprep.subr.mxu0 0.0
    %472 = vmatpush2.msra.mxu0 0.0
    %473 = vmatprep.subr.mxu0 0.0
    %474 = vmatpush2.msra.mxu0 0.0
    %475 = vmatprep.subr.mxu0 0.0
    %476 = vmatpush2.msra.mxu0 0.0
    %477 = vmatprep.subr.mxu0 0.0
    %478 = vmatpush2.msra.mxu0 0.0
    %479 = vmatprep.subr.mxu0 0.0
    %480 = vmatpush2.msra.mxu0 0.0
    %481 = vmatprep.subr.mxu0 0.0
    %482 = vmatpush2.msra.mxu0 0.0
    %483 = vmatprep.subr.mxu0 0.0
    %484 = vmatpush2.msra.mxu0 0.0
    %485 = vmatprep.subr.mxu0 0.0
    %486 = vmatpush2.msra.mxu0 0.0
    %487 = vmatprep.subr.mxu0 0.0
    %488 = vmatpush2.msra.mxu0 0.0
    %489 = vmatprep.subr.mxu0 0.0
    %490 = vmatpush2.msra.mxu0 0.0
    %491 = vmatprep.subr.mxu0 0.0
    %492 = vmatpush2.msra.mxu0 0.0
    %493 = vmatprep.subr.mxu0 0.0
    %494 = vmatpush2.msra.mxu0 0.0
    %495 = vmatprep.mubr.f32.mxu0 0.0
    %496 = vmatmul.mubr.f32.gmra.mxu0 %v429
    %v497 = vpop.f32.mrf.mxu0
    %v498 = vadd.f32 0.0, %v497
    %v499 = vpop.f32.mrf.mxu0
    %500 = vdwg.mxu0
    %v502 = vrot.slane %v498, 2
    %v504 = vadd.f32 %v192, %v502
    %v505 = vtanh.pop %v504
    %506 = vst [vmem:[#allocation2] sm:$0xc0] %v505
    %v508 = vrot.slane %v505, 6
    %510 = vmatprep.subr.mxu0 0.0
    %511 = vmatpush1.msra.mxu0 %v104
    %512 = vmatprep.subr.mxu0 0.0
    %513 = vmatpush1.msra.mxu0 %v103
    %514 = vmatprep.subr.mxu0 0.0
    %515 = vmatpush1.msra.mxu0 %v102
    %516 = vmatprep.subr.mxu0 0.0
    %517 = vmatpush1.msra.mxu0 %v101
    %518 = vmatprep.subr.mxu0 0.0
    %519 = vmatpush1.msra.mxu0 %v100
    %520 = vmatprep.subr.mxu0 0.0
    %521 = vmatpush1.msra.mxu0 %v99
    %522 = vmatprep.subr.mxu0 0.0
    %523 = vmatpush1.msra.mxu0 %v98
    %524 = vmatprep.subr.mxu0 0.0
    %525 = vmatpush1.msra.mxu0 %v97
    %526 = vmatprep.subr.mxu0 0.0
    %527 = vmatpush1.msra.mxu0 %v96
    %528 = vmatprep.subr.mxu0 0.0
    %529 = vmatpush1.msra.mxu0 %v95
    %530 = vmatprep.subr.mxu0 0.0
    %531 = vmatpush1.msra.mxu0 %v94
    %532 = vmatprep.subr.mxu0 0.0
    %533 = vmatpush1.msra.mxu0 %v93
    %534 = vmatprep.subr.mxu0 0.0
    %535 = vmatpush1.msra.mxu0 %v92
    %536 = vmatprep.subr.mxu0 0.0
    %537 = vmatpush1.msra.mxu0 %v91
    %538 = vmatprep.subr.mxu0 0.0
    %539 = vmatpush1.msra.mxu0 %v90
    %540 = vmatprep.subr.mxu0 0.0
    %541 = vmatpush1.msra.mxu0 %v89
    %542 = vmatprep.subr.mxu0 0.0
    %543 = vmatpush2.msra.mxu0 0.0
    %544 = vmatprep.subr.mxu0 0.0
    %545 = vmatpush2.msra.mxu0 0.0
    %546 = vmatprep.subr.mxu0 0.0
    %547 = vmatpush2.msra.mxu0 0.0
    %548 = vmatprep.subr.mxu0 0.0
    %549 = vmatpush2.msra.mxu0 0.0
    %550 = vmatprep.subr.mxu0 0.0
    %551 = vmatpush2.msra.mxu0 0.0
    %552 = vmatprep.subr.mxu0 0.0
    %553 = vmatpush2.msra.mxu0 0.0
    %554 = vmatprep.subr.mxu0 0.0
    %555 = vmatpush2.msra.mxu0 0.0
    %556 = vmatprep.subr.mxu0 0.0
    %557 = vmatpush2.msra.mxu0 0.0
    %558 = vmatprep.subr.mxu0 0.0
    %559 = vmatpush2.msra.mxu0 0.0
    %560 = vmatprep.subr.mxu0 0.0
    %561 = vmatpush2.msra.mxu0 0.0
    %562 = vmatprep.subr.mxu0 0.0
    %563 = vmatpush2.msra.mxu0 0.0
    %564 = vmatprep.subr.mxu0 0.0
    %565 = vmatpush2.msra.mxu0 0.0
    %566 = vmatprep.subr.mxu0 0.0
    %567 = vmatpush2.msra.mxu0 0.0
    %568 = vmatprep.subr.mxu0 0.0
    %569 = vmatpush2.msra.mxu0 0.0
    %570 = vmatprep.subr.mxu0 0.0
    %571 = vmatpush2.msra.mxu0 0.0
    %572 = vmatprep.subr.mxu0 0.0
    %573 = vmatpush2.msra.mxu0 0.0
    %574 = vmatprep.mubr.f32.mxu0 0.0
    %575 = vmatmul.mubr.f32.gmra.mxu0 %v508
    %v576 = vpop.f32.mrf.mxu0
    %v577 = vadd.f32 0.0, %v576
    %v578 = vpop.f32.mrf.mxu0
    %579 = vdwg.mxu0
    %v580 = vadd.f32 %v197, %v577
    %v581 = vtanh.pop %v580
    %582 = vst [vmem:[#allocation2 + $0x8] sm:$0x3] %v581
    %583 = vmatprep.subr.mxu0 0.0
    %584 = vmatpush1.msra.mxu0 %v104
    %585 = vmatprep.subr.mxu0 0.0
    %586 = vmatpush1.msra.mxu0 %v103
    %587 = vmatprep.subr.mxu0 0.0
    %588 = vmatpush1.msra.mxu0 %v102
    %589 = vmatprep.subr.mxu0 0.0
    %590 = vmatpush1.msra.mxu0 %v101
    %591 = vmatprep.subr.mxu0 0.0
    %592 = vmatpush1.msra.mxu0 %v100
    %593 = vmatprep.subr.mxu0 0.0
    %594 = vmatpush1.msra.mxu0 %v99
    %595 = vmatprep.subr.mxu0 0.0
    %596 = vmatpush1.msra.mxu0 %v98
    %597 = vmatprep.subr.mxu0 0.0
    %598 = vmatpush1.msra.mxu0 %v97
    %599 = vmatprep.subr.mxu0 0.0
    %600 = vmatpush1.msra.mxu0 %v96
    %601 = vmatprep.subr.mxu0 0.0
    %602 = vmatpush1.msra.mxu0 %v95
    %603 = vmatprep.subr.mxu0 0.0
    %604 = vmatpush1.msra.mxu0 %v94
    %605 = vmatprep.subr.mxu0 0.0
    %606 = vmatpush1.msra.mxu0 %v93
    %607 = vmatprep.subr.mxu0 0.0
    %608 = vmatpush1.msra.mxu0 %v92
    %609 = vmatprep.subr.mxu0 0.0
    %610 = vmatpush1.msra.mxu0 %v91
    %611 = vmatprep.subr.mxu0 0.0
    %612 = vmatpush1.msra.mxu0 %v90
    %613 = vmatprep.subr.mxu0 0.0
    %614 = vmatpush1.msra.mxu0 %v89
    %615 = vmatprep.subr.mxu0 0.0
    %616 = vmatpush2.msra.mxu0 0.0
    %617 = vmatprep.subr.mxu0 0.0
    %618 = vmatpush2.msra.mxu0 0.0
    %619 = vmatprep.subr.mxu0 0.0
    %620 = vmatpush2.msra.mxu0 0.0
    %621 = vmatprep.subr.mxu0 0.0
    %622 = vmatpush2.msra.mxu0 0.0
    %623 = vmatprep.subr.mxu0 0.0
    %624 = vmatpush2.msra.mxu0 0.0
    %625 = vmatprep.subr.mxu0 0.0
    %626 = vmatpush2.msra.mxu0 0.0
    %627 = vmatprep.subr.mxu0 0.0
    %628 = vmatpush2.msra.mxu0 0.0
    %629 = vmatprep.subr.mxu0 0.0
    %630 = vmatpush2.msra.mxu0 0.0
    %631 = vmatprep.subr.mxu0 0.0
    %632 = vmatpush2.msra.mxu0 0.0
    %633 = vmatprep.subr.mxu0 0.0
    %634 = vmatpush2.msra.mxu0 0.0
    %635 = vmatprep.subr.mxu0 0.0
    %636 = vmatpush2.msra.mxu0 0.0
    %637 = vmatprep.subr.mxu0 0.0
    %638 = vmatpush2.msra.mxu0 0.0
    %639 = vmatprep.subr.mxu0 0.0
    %640 = vmatpush2.msra.mxu0 0.0
    %641 = vmatprep.subr.mxu0 0.0
    %642 = vmatpush2.msra.mxu0 0.0
    %643 = vmatprep.subr.mxu0 0.0
    %644 = vmatpush2.msra.mxu0 0.0
    %645 = vmatprep.subr.mxu0 0.0
    %646 = vmatpush2.msra.mxu0 0.0
    %647 = vmatprep.mubr.f32.mxu0 0.0
    %648 = vmatmul.mubr.f32.gmra.mxu0 %v581
    %v649 = vpop.f32.mrf.mxu0
    %v650 = vadd.f32 0.0, %v649
    %v651 = vpop.f32.mrf.mxu0
    %652 = vdwg.mxu0
    %v654 = vrot.slane %v650, 6
    %v656 = vadd.f32 %v197, %v654
    %v657 = vtanh.pop %v656
    %658 = vst [vmem:[#allocation2 + $0x8] sm:$0xc] %v657
    %v660 = vrot.slane %v657, 2
    %662 = vmatprep.subr.mxu0 0.0
    %663 = vmatpush1.msra.mxu0 %v104
    %664 = vmatprep.subr.mxu0 0.0
    %665 = vmatpush1.msra.mxu0 %v103
    %666 = vmatprep.subr.mxu0 0.0
    %667 = vmatpush1.msra.mxu0 %v102
    %668 = vmatprep.subr.mxu0 0.0
    %669 = vmatpush1.msra.mxu0 %v101
    %670 = vmatprep.subr.mxu0 0.0
    %671 = vmatpush1.msra.mxu0 %v100
    %672 = vmatprep.subr.mxu0 0.0
    %673 = vmatpush1.msra.mxu0 %v99
    %674 = vmatprep.subr.mxu0 0.0
    %675 = vmatpush1.msra.mxu0 %v98
    %676 = vmatprep.subr.mxu0 0.0
    %677 = vmatpush1.msra.mxu0 %v97
    %678 = vmatprep.subr.mxu0 0.0
    %679 = vmatpush1.msra.mxu0 %v96
    %680 = vmatprep.subr.mxu0 0.0
    %681 = vmatpush1.msra.mxu0 %v95
    %682 = vmatprep.subr.mxu0 0.0
    %683 = vmatpush1.msra.mxu0 %v94
    %684 = vmatprep.subr.mxu0 0.0
    %685 = vmatpush1.msra.mxu0 %v93
    %686 = vmatprep.subr.mxu0 0.0
    %687 = vmatpush1.msra.mxu0 %v92
    %688 = vmatprep.subr.mxu0 0.0
    %689 = vmatpush1.msra.mxu0 %v91
    %690 = vmatprep.subr.mxu0 0.0
    %691 = vmatpush1.msra.mxu0 %v90
    %692 = vmatprep.subr.mxu0 0.0
    %693 = vmatpush1.msra.mxu0 %v89
    %694 = vmatprep.subr.mxu0 0.0
    %695 = vmatpush2.msra.mxu0 0.0
    %696 = vmatprep.subr.mxu0 0.0
    %697 = vmatpush2.msra.mxu0 0.0
    %698 = vmatprep.subr.mxu0 0.0
    %699 = vmatpush2.msra.mxu0 0.0
    %700 = vmatprep.subr.mxu0 0.0
    %701 = vmatpush2.msra.mxu0 0.0
    %702 = vmatprep.subr.mxu0 0.0
    %703 = vmatpush2.msra.mxu0 0.0
    %704 = vmatprep.subr.mxu0 0.0
    %705 = vmatpush2.msra.mxu0 0.0
    %706 = vmatprep.subr.mxu0 0.0
    %707 = vmatpush2.msra.mxu0 0.0
    %708 = vmatprep.subr.mxu0 0.0
    %709 = vmatpush2.msra.mxu0 0.0
    %710 = vmatprep.subr.mxu0 0.0
    %711 = vmatpush2.msra.mxu0 0.0
    %712 = vmatprep.subr.mxu0 0.0
    %713 = vmatpush2.msra.mxu0 0.0
    %714 = vmatprep.subr.mxu0 0.0
    %715 = vmatpush2.msra.mxu0 0.0
    %716 = vmatprep.subr.mxu0 0.0
    %717 = vmatpush2.msra.mxu0 0.0
    %718 = vmatprep.subr.mxu0 0.0
    %719 = vmatpush2.msra.mxu0 0.0
    %720 = vmatprep.subr.mxu0 0.0
    %721 = vmatpush2.msra.mxu0 0.0
    %722 = vmatprep.subr.mxu0 0.0
    %723 = vmatpush2.msra.mxu0 0.0
    %724 = vmatprep.subr.mxu0 0.0
    %725 = vmatpush2.msra.mxu0 0.0
    %726 = vmatprep.mubr.f32.mxu0 0.0
    %727 = vmatmul.mubr.f32.gmra.mxu0 %v660
    %v728 = vpop.f32.mrf.mxu0
    %v729 = vadd.f32 0.0, %v728
    %v730 = vpop.f32.mrf.mxu0
    %731 = vdwg.mxu0
    %v733 = vrot.slane %v729, 4
    %v735 = vadd.f32 %v197, %v733
    %v736 = vtanh.pop %v735
    %737 = vst [vmem:[#allocation2 + $0x8] sm:$0x30] %v736
    %v739 = vrot.slane %v736, 4
    %741 = vmatprep.subr.mxu0 0.0
    %742 = vmatpush1.msra.mxu0 %v104
    %743 = vmatprep.subr.mxu0 0.0
    %744 = vmatpush1.msra.mxu0 %v103
    %745 = vmatprep.subr.mxu0 0.0
    %746 = vmatpush1.msra.mxu0 %v102
    %747 = vmatprep.subr.mxu0 0.0
    %748 = vmatpush1.msra.mxu0 %v101
    %749 = vmatprep.subr.mxu0 0.0
    %750 = vmatpush1.msra.mxu0 %v100
    %751 = vmatprep.subr.mxu0 0.0
    %752 = vmatpush1.msra.mxu0 %v99
    %753 = vmatprep.subr.mxu0 0.0
    %754 = vmatpush1.msra.mxu0 %v98
    %755 = vmatprep.subr.mxu0 0.0
    %756 = vmatpush1.msra.mxu0 %v97
    %757 = vmatprep.subr.mxu0 0.0
    %758 = vmatpush1.msra.mxu0 %v96
    %759 = vmatprep.subr.mxu0 0.0
    %760 = vmatpush1.msra.mxu0 %v95
    %761 = vmatprep.subr.mxu0 0.0
    %762 = vmatpush1.msra.mxu0 %v94
    %763 = vmatprep.subr.mxu0 0.0
    %764 = vmatpush1.msra.mxu0 %v93
    %765 = vmatprep.subr.mxu0 0.0
    %766 = vmatpush1.msra.mxu0 %v92
    %767 = vmatprep.subr.mxu0 0.0
    %768 = vmatpush1.msra.mxu0 %v91
    %769 = vmatprep.subr.mxu0 0.0
    %770 = vmatpush1.msra.mxu0 %v90
    %771 = vmatprep.subr.mxu0 0.0
    %772 = vmatpush1.msra.mxu0 %v89
    %773 = vmatprep.subr.mxu0 0.0
    %774 = vmatpush2.msra.mxu0 0.0
    %775 = vmatprep.subr.mxu0 0.0
    %776 = vmatpush2.msra.mxu0 0.0
    %777 = vmatprep.subr.mxu0 0.0
    %778 = vmatpush2.msra.mxu0 0.0
    %779 = vmatprep.subr.mxu0 0.0
    %780 = vmatpush2.msra.mxu0 0.0
    %781 = vmatprep.subr.mxu0 0.0
    %782 = vmatpush2.msra.mxu0 0.0
    %783 = vmatprep.subr.mxu0 0.0
    %784 = vmatpush2.msra.mxu0 0.0
    %785 = vmatprep.subr.mxu0 0.0
    %786 = vmatpush2.msra.mxu0 0.0
    %787 = vmatprep.subr.mxu0 0.0
    %788 = vmatpush2.msra.mxu0 0.0
    %789 = vmatprep.subr.mxu0 0.0
    %790 = vmatpush2.msra.mxu0 0.0
    %791 = vmatprep.subr.mxu0 0.0
    %792 = vmatpush2.msra.mxu0 0.0
    %793 = vmatprep.subr.mxu0 0.0
    %794 = vmatpush2.msra.mxu0 0.0
    %795 = vmatprep.subr.mxu0 0.0
    %796 = vmatpush2.msra.mxu0 0.0
    %797 = vmatprep.subr.mxu0 0.0
    %798 = vmatpush2.msra.mxu0 0.0
    %799 = vmatprep.subr.mxu0 0.0
    %800 = vmatpush2.msra.mxu0 0.0
    %801 = vmatprep.subr.mxu0 0.0
    %802 = vmatpush2.msra.mxu0 0.0
    %803 = vmatprep.subr.mxu0 0.0
    %804 = vmatpush2.msra.mxu0 0.0
    %805 = vmatprep.mubr.f32.mxu0 0.0
    %806 = vmatmul.mubr.f32.gmra.mxu0 %v739
    %v807 = vpop.f32.mrf.mxu0
    %v808 = vadd.f32 0.0, %v807
    %v809 = vpop.f32.mrf.mxu0
    %810 = vdwg.mxu0
    %v812 = vrot.slane %v808, 2
    %v814 = vadd.f32 %v197, %v812
    %v815 = vtanh.pop %v814
    %816 = vst [vmem:[#allocation2 + $0x8] sm:$0xc0] %v815
    %v817 = vld [vmem:[#allocation6] sm:$0xff]
    %v818 = vld [vmem:[#allocation6 + $0x8] sm:$0xff]
    %v819 = vld [vmem:[#allocation6 + $0x10] sm:$0xff]
    %v820 = vld [vmem:[#allocation6 + $0x18] sm:$0xff]
    %v821 = vld [vmem:[#allocation6 + $0x20] sm:$0xff]
    %v822 = vld [vmem:[#allocation6 + $0x28] sm:$0xff]
    %v823 = vld [vmem:[#allocation6 + $0x30] sm:$0xff]
    %v824 = vld [vmem:[#allocation6 + $0x38] sm:$0xff]
    %v825 = vld [vmem:[#allocation6 + $0x40] sm:$0xff]
    %v826 = vld [vmem:[#allocation6 + $0x48] sm:$0xff]
    %v827 = vld [vmem:[#allocation6 + $0x50] sm:$0xff]
    %v828 = vld [vmem:[#allocation6 + $0x58] sm:$0xff]
    %v829 = vld [vmem:[#allocation6 + $0x60] sm:$0xff]
    %v830 = vld [vmem:[#allocation6 + $0x68] sm:$0xff]
    %v831 = vld [vmem:[#allocation6 + $0x70] sm:$0xff]
    %v832 = vld [vmem:[#allocation6 + $0x78] sm:$0xff]
    %v833 = vld [vmem:[#allocation8] sm:$0xff]
    %v834 = vld [vmem:[#allocation8 + $0x8] sm:$0xff]
    %v835 = vld [vmem:[#allocation8 + $0x10] sm:$0xff]
    %v836 = vld [vmem:[#allocation8 + $0x18] sm:$0xff]
    %v837 = vld [vmem:[#allocation8 + $0x20] sm:$0xff]
    %v838 = vld [vmem:[#allocation8 + $0x28] sm:$0xff]
    %v839 = vld [vmem:[#allocation8 + $0x30] sm:$0xff]
    %v840 = vld [vmem:[#allocation8 + $0x38] sm:$0xff]
    %v841 = vld [vmem:[#allocation8 + $0x40] sm:$0xff]
    %v842 = vld [vmem:[#allocation8 + $0x48] sm:$0xff]
    %v843 = vld [vmem:[#allocation8 + $0x50] sm:$0xff]
    %v844 = vld [vmem:[#allocation8 + $0x58] sm:$0xff]
    %v845 = vld [vmem:[#allocation8 + $0x60] sm:$0xff]
    %v846 = vld [vmem:[#allocation8 + $0x68] sm:$0xff]
    %v847 = vld [vmem:[#allocation8 + $0x70] sm:$0xff]
    %v848 = vld [vmem:[#allocation8 + $0x78] sm:$0xff]
    %v849 = vld [vmem:[%s6] sm:$0x1]
    %v850 = vld [vmem:[#allocation2] sm:$0xff]
    %v851 = vld [vmem:[#allocation2 + $0x8] sm:$0xff]
    %v853 = vlaneseq
    %v854 = vshrl.u32 %v853, 7
    %v855 = vsub.s32 0, %v854
    %v856 = vrot.slane %v849, %v855
    %858 = vmatprep.subr.mxu0 0.0
    %859 = vmatpush1.msra.mxu0 %v832
    %860 = vmatprep.subr.mxu0 0.0
    %861 = vmatpush1.msra.mxu0 %v831
    %862 = vmatprep.subr.mxu0 0.0
    %863 = vmatpush1.msra.mxu0 %v830
    %864 = vmatprep.subr.mxu0 0.0
    %865 = vmatpush1.msra.mxu0 %v829
    %866 = vmatprep.subr.mxu0 0.0
    %867 = vmatpush1.msra.mxu0 %v828
    %868 = vmatprep.subr.mxu0 0.0
    %869 = vmatpush1.msra.mxu0 %v827
    %870 = vmatprep.subr.mxu0 0.0
    %871 = vmatpush1.msra.mxu0 %v826
    %872 = vmatprep.subr.mxu0 0.0
    %873 = vmatpush1.msra.mxu0 %v825
    %874 = vmatprep.subr.mxu0 0.0
    %875 = vmatpush1.msra.mxu0 %v824
    %876 = vmatprep.subr.mxu0 0.0
    %877 = vmatpush1.msra.mxu0 %v823
    %878 = vmatprep.subr.mxu0 0.0
    %879 = vmatpush1.msra.mxu0 %v822
    %880 = vmatprep.subr.mxu0 0.0
    %881 = vmatpush1.msra.mxu0 %v821
    %882 = vmatprep.subr.mxu0 0.0
    %883 = vmatpush1.msra.mxu0 %v820
    %884 = vmatprep.subr.mxu0 0.0
    %885 = vmatpush1.msra.mxu0 %v819
    %886 = vmatprep.subr.mxu0 0.0
    %887 = vmatpush1.msra.mxu0 %v818
    %888 = vmatprep.subr.mxu0 0.0
    %889 = vmatpush1.msra.mxu0 %v817
    %890 = vmatprep.subr.mxu0 0.0
    %891 = vmatpush2.msra.mxu0 0.0
    %892 = vmatprep.subr.mxu0 0.0
    %893 = vmatpush2.msra.mxu0 0.0
    %894 = vmatprep.subr.mxu0 0.0
    %895 = vmatpush2.msra.mxu0 0.0
    %896 = vmatprep.subr.mxu0 0.0
    %897 = vmatpush2.msra.mxu0 0.0
    %898 = vmatprep.subr.mxu0 0.0
    %899 = vmatpush2.msra.mxu0 0.0
    %900 = vmatprep.subr.mxu0 0.0
    %901 = vmatpush2.msra.mxu0 0.0
    %902 = vmatprep.subr.mxu0 0.0
    %903 = vmatpush2.msra.mxu0 0.0
    %904 = vmatprep.subr.mxu0 0.0
    %905 = vmatpush2.msra.mxu0 0.0
    %906 = vmatprep.subr.mxu0 0.0
    %907 = vmatpush2.msra.mxu0 0.0
    %908 = vmatprep.subr.mxu0 0.0
    %909 = vmatpush2.msra.mxu0 0.0
    %910 = vmatprep.subr.mxu0 0.0
    %911 = vmatpush2.msra.mxu0 0.0
    %912 = vmatprep.subr.mxu0 0.0
    %913 = vmatpush2.msra.mxu0 0.0
    %914 = vmatprep.subr.mxu0 0.0
    %915 = vmatpush2.msra.mxu0 0.0
    %916 = vmatprep.subr.mxu0 0.0
    %917 = vmatpush2.msra.mxu0 0.0
    %918 = vmatprep.subr.mxu0 0.0
    %919 = vmatpush2.msra.mxu0 0.0
    %920 = vmatprep.subr.mxu0 0.0
    %921 = vmatpush2.msra.mxu0 0.0
    %922 = vmatprep.mubr.f32.mxu0 0.0
    %923 = vmatmul.mubr.f32.gmra.mxu0 %v850
    %v924 = vpop.f32.mrf.mxu0
    %v925 = vadd.f32 %v856, %v924
    %v926 = vpop.f32.mrf.mxu0
    %927 = vmatprep.mubr.f32.mxu0 0.0
    %928 = vmatmul.mubr.f32.gmra.mxu0 %v851
    %v929 = vpop.f32.mrf.mxu0
    %v930 = vadd.f32 %v856, %v929
    %v931 = vpop.f32.mrf.mxu0
    %932 = vdwg.mxu0
    %933 = vmatprep.subr.mxu0 0.0
    %934 = vmatpush1.msra.mxu0 %v848
    %935 = vmatprep.subr.mxu0 0.0
    %936 = vmatpush1.msra.mxu0 %v847
    %937 = vmatprep.subr.mxu0 0.0
    %938 = vmatpush1.msra.mxu0 %v846
    %939 = vmatprep.subr.mxu0 0.0
    %940 = vmatpush1.msra.mxu0 %v845
    %941 = vmatprep.subr.mxu0 0.0
    %942 = vmatpush1.msra.mxu0 %v844
    %943 = vmatprep.subr.mxu0 0.0
    %944 = vmatpush1.msra.mxu0 %v843
    %945 = vmatprep.subr.mxu0 0.0
    %946 = vmatpush1.msra.mxu0 %v842
    %947 = vmatprep.subr.mxu0 0.0
    %948 = vmatpush1.msra.mxu0 %v841
    %949 = vmatprep.subr.mxu0 0.0
    %950 = vmatpush1.msra.mxu0 %v840
    %951 = vmatprep.subr.mxu0 0.0
    %952 = vmatpush1.msra.mxu0 %v839
    %953 = vmatprep.subr.mxu0 0.0
    %954 = vmatpush1.msra.mxu0 %v838
    %955 = vmatprep.subr.mxu0 0.0
    %956 = vmatpush1.msra.mxu0 %v837
    %957 = vmatprep.subr.mxu0 0.0
    %958 = vmatpush1.msra.mxu0 %v836
    %959 = vmatprep.subr.mxu0 0.0
    %960 = vmatpush1.msra.mxu0 %v835
    %961 = vmatprep.subr.mxu0 0.0
    %962 = vmatpush1.msra.mxu0 %v834
    %963 = vmatprep.subr.mxu0 0.0
    %964 = vmatpush1.msra.mxu0 %v833
    %965 = vmatprep.subr.mxu0 0.0
    %966 = vmatpush2.msra.mxu0 0.0
    %967 = vmatprep.subr.mxu0 0.0
    %968 = vmatpush2.msra.mxu0 0.0
    %969 = vmatprep.subr.mxu0 0.0
    %970 = vmatpush2.msra.mxu0 0.0
    %971 = vmatprep.subr.mxu0 0.0
    %972 = vmatpush2.msra.mxu0 0.0
    %973 = vmatprep.subr.mxu0 0.0
    %974 = vmatpush2.msra.mxu0 0.0
    %975 = vmatprep.subr.mxu0 0.0
    %976 = vmatpush2.msra.mxu0 0.0
    %977 = vmatprep.subr.mxu0 0.0
    %978 = vmatpush2.msra.mxu0 0.0
    %979 = vmatprep.subr.mxu0 0.0
    %980 = vmatpush2.msra.mxu0 0.0
    %981 = vmatprep.subr.mxu0 0.0
    %982 = vmatpush2.msra.mxu0 0.0
    %983 = vmatprep.subr.mxu0 0.0
    %984 = vmatpush2.msra.mxu0 0.0
    %985 = vmatprep.subr.mxu0 0.0
    %986 = vmatpush2.msra.mxu0 0.0
    %987 = vmatprep.subr.mxu0 0.0
    %988 = vmatpush2.msra.mxu0 0.0
    %989 = vmatprep.subr.mxu0 0.0
    %990 = vmatpush2.msra.mxu0 0.0
    %991 = vmatprep.subr.mxu0 0.0
    %992 = vmatpush2.msra.mxu0 0.0
    %993 = vmatprep.subr.mxu0 0.0
    %994 = vmatpush2.msra.mxu0 0.0
    %995 = vmatprep.subr.mxu0 0.0
    %996 = vmatpush2.msra.mxu0 0.0
    %997 = vmatprep.mubr.f32.mxu0 0.0
    %998 = vmatmul.mubr.f32.gmra.mxu0 0.0
    %v999 = vpop.f32.mrf.mxu0
    %v1000 = vadd.f32 0.0, %v999
    %v1001 = vpop.f32.mrf.mxu0
    %1002 = vdwg.mxu0
    %v1003 = vadd.f32 %v925, %v1000
    %v1004 = vtanh.pop %v1003
    %1005 = vmatprep.subr.mxu0 0.0
    %1006 = vmatpush1.msra.mxu0 %v848
    %1007 = vmatprep.subr.mxu0 0.0
    %1008 = vmatpush1.msra.mxu0 %v847
    %1009 = vmatprep.subr.mxu0 0.0
    %1010 = vmatpush1.msra.mxu0 %v846
    %1011 = vmatprep.subr.mxu0 0.0
    %1012 = vmatpush1.msra.mxu0 %v845
    %1013 = vmatprep.subr.mxu0 0.0
    %1014 = vmatpush1.msra.mxu0 %v844
    %1015 = vmatprep.subr.mxu0 0.0
    %1016 = vmatpush1.msra.mxu0 %v843
    %1017 = vmatprep.subr.mxu0 0.0
    %1018 = vmatpush1.msra.mxu0 %v842
    %1019 = vmatprep.subr.mxu0 0.0
    %1020 = vmatpush1.msra.mxu0 %v841
    %1021 = vmatprep.subr.mxu0 0.0
    %1022 = vmatpush1.msra.mxu0 %v840
    %1023 = vmatprep.subr.mxu0 0.0
    %1024 = vmatpush1.msra.mxu0 %v839
    %1025 = vmatprep.subr.mxu0 0.0
    %1026 = vmatpush1.msra.mxu0 %v838
    %1027 = vmatprep.subr.mxu0 0.0
    %1028 = vmatpush1.msra.mxu0 %v837
    %1029 = vmatprep.subr.mxu0 0.0
    %1030 = vmatpush1.msra.mxu0 %v836
    %1031 = vmatprep.subr.mxu0 0.0
    %1032 = vmatpush1.msra.mxu0 %v835
    %1033 = vmatprep.subr.mxu0 0.0
    %1034 = vmatpush1.msra.mxu0 %v834
    %1035 = vmatprep.subr.mxu0 0.0
    %1036 = vmatpush1.msra.mxu0 %v833
    %1037 = vmatprep.subr.mxu0 0.0
    %1038 = vmatpush2.msra.mxu0 0.0
    %1039 = vmatprep.subr.mxu0 0.0
    %1040 = vmatpush2.msra.mxu0 0.0
    %1041 = vmatprep.subr.mxu0 0.0
    %1042 = vmatpush2.msra.mxu0 0.0
    %1043 = vmatprep.subr.mxu0 0.0
    %1044 = vmatpush2.msra.mxu0 0.0
    %1045 = vmatprep.subr.mxu0 0.0
    %1046 = vmatpush2.msra.mxu0 0.0
    %1047 = vmatprep.subr.mxu0 0.0
    %1048 = vmatpush2.msra.mxu0 0.0
    %1049 = vmatprep.subr.mxu0 0.0
    %1050 = vmatpush2.msra.mxu0 0.0
    %1051 = vmatprep.subr.mxu0 0.0
    %1052 = vmatpush2.msra.mxu0 0.0
    %1053 = vmatprep.subr.mxu0 0.0
    %1054 = vmatpush2.msra.mxu0 0.0
    %1055 = vmatprep.subr.mxu0 0.0
    %1056 = vmatpush2.msra.mxu0 0.0
    %1057 = vmatprep.subr.mxu0 0.0
    %1058 = vmatpush2.msra.mxu0 0.0
    %1059 = vmatprep.subr.mxu0 0.0
    %1060 = vmatpush2.msra.mxu0 0.0
    %1061 = vmatprep.subr.mxu0 0.0
    %1062 = vmatpush2.msra.mxu0 0.0
    %1063 = vmatprep.subr.mxu0 0.0
    %1064 = vmatpush2.msra.mxu0 0.0
    %1065 = vmatprep.subr.mxu0 0.0
    %1066 = vmatpush2.msra.mxu0 0.0
    %1067 = vmatprep.subr.mxu0 0.0
    %1068 = vmatpush2.msra.mxu0 0.0
    %1069 = vmatprep.mubr.f32.mxu0 0.0
    %1070 = vmatmul.mubr.f32.gmra.mxu0 %v1004
    %v1071 = vpop.f32.mrf.mxu0
    %v1072 = vadd.f32 0.0, %v1071
    %v1073 = vpop.f32.mrf.mxu0
    %1074 = vdwg.mxu0
    %v1076 = vrot.slane %v1072, 6
    %v1078 = vadd.f32 %v925, %v1076
    %v1079 = vtanh.pop %v1078
    %v1081 = vrot.slane %v1079, 2
    %1083 = vmatprep.subr.mxu0 0.0
    %1084 = vmatpush1.msra.mxu0 %v848
    %1085 = vmatprep.subr.mxu0 0.0
    %1086 = vmatpush1.msra.mxu0 %v847
    %1087 = vmatprep.subr.mxu0 0.0
    %1088 = vmatpush1.msra.mxu0 %v846
    %1089 = vmatprep.subr.mxu0 0.0
    %1090 = vmatpush1.msra.mxu0 %v845
    %1091 = vmatprep.subr.mxu0 0.0
    %1092 = vmatpush1.msra.mxu0 %v844
    %1093 = vmatprep.subr.mxu0 0.0
    %1094 = vmatpush1.msra.mxu0 %v843
    %1095 = vmatprep.subr.mxu0 0.0
    %1096 = vmatpush1.msra.mxu0 %v842
    %1097 = vmatprep.subr.mxu0 0.0
    %1098 = vmatpush1.msra.mxu0 %v841
    %1099 = vmatprep.subr.mxu0 0.0
    %1100 = vmatpush1.msra.mxu0 %v840
    %1101 = vmatprep.subr.mxu0 0.0
    %1102 = vmatpush1.msra.mxu0 %v839
    %1103 = vmatprep.subr.mxu0 0.0
    %1104 = vmatpush1.msra.mxu0 %v838
    %1105 = vmatprep.subr.mxu0 0.0
    %1106 = vmatpush1.msra.mxu0 %v837
    %1107 = vmatprep.subr.mxu0 0.0
    %1108 = vmatpush1.msra.mxu0 %v836
    %1109 = vmatprep.subr.mxu0 0.0
    %1110 = vmatpush1.msra.mxu0 %v835
    %1111 = vmatprep.subr.mxu0 0.0
    %1112 = vmatpush1.msra.mxu0 %v834
    %1113 = vmatprep.subr.mxu0 0.0
    %1114 = vmatpush1.msra.mxu0 %v833
    %1115 = vmatprep.subr.mxu0 0.0
    %1116 = vmatpush2.msra.mxu0 0.0
    %1117 = vmatprep.subr.mxu0 0.0
    %1118 = vmatpush2.msra.mxu0 0.0
    %1119 = vmatprep.subr.mxu0 0.0
    %1120 = vmatpush2.msra.mxu0 0.0
    %1121 = vmatprep.subr.mxu0 0.0
    %1122 = vmatpush2.msra.mxu0 0.0
    %1123 = vmatprep.subr.mxu0 0.0
    %1124 = vmatpush2.msra.mxu0 0.0
    %1125 = vmatprep.subr.mxu0 0.0
    %1126 = vmatpush2.msra.mxu0 0.0
    %1127 = vmatprep.subr.mxu0 0.0
    %1128 = vmatpush2.msra.mxu0 0.0
    %1129 = vmatprep.subr.mxu0 0.0
    %1130 = vmatpush2.msra.mxu0 0.0
    %1131 = vmatprep.subr.mxu0 0.0
    %1132 = vmatpush2.msra.mxu0 0.0
    %1133 = vmatprep.subr.mxu0 0.0
    %1134 = vmatpush2.msra.mxu0 0.0
    %1135 = vmatprep.subr.mxu0 0.0
    %1136 = vmatpush2.msra.mxu0 0.0
    %1137 = vmatprep.subr.mxu0 0.0
    %1138 = vmatpush2.msra.mxu0 0.0
    %1139 = vmatprep.subr.mxu0 0.0
    %1140 = vmatpush2.msra.mxu0 0.0
    %1141 = vmatprep.subr.mxu0 0.0
    %1142 = vmatpush2.msra.mxu0 0.0
    %1143 = vmatprep.subr.mxu0 0.0
    %1144 = vmatpush2.msra.mxu0 0.0
    %1145 = vmatprep.subr.mxu0 0.0
    %1146 = vmatpush2.msra.mxu0 0.0
    %1147 = vmatprep.mubr.f32.mxu0 0.0
    %1148 = vmatmul.mubr.f32.gmra.mxu0 %v1081
    %v1149 = vpop.f32.mrf.mxu0
    %v1150 = vadd.f32 0.0, %v1149
    %v1151 = vpop.f32.mrf.mxu0
    %1152 = vdwg.mxu0
    %v1154 = vrot.slane %v1150, 4
    %v1156 = vadd.f32 %v925, %v1154
    %v1157 = vtanh.pop %v1156
    %v1159 = vrot.slane %v1157, 4
    %1161 = vmatprep.subr.mxu0 0.0
    %1162 = vmatpush1.msra.mxu0 %v848
    %1163 = vmatprep.subr.mxu0 0.0
    %1164 = vmatpush1.msra.mxu0 %v847
    %1165 = vmatprep.subr.mxu0 0.0
    %1166 = vmatpush1.msra.mxu0 %v846
    %1167 = vmatprep.subr.mxu0 0.0
    %1168 = vmatpush1.msra.mxu0 %v845
    %1169 = vmatprep.subr.mxu0 0.0
    %1170 = vmatpush1.msra.mxu0 %v844
    %1171 = vmatprep.subr.mxu0 0.0
    %1172 = vmatpush1.msra.mxu0 %v843
    %1173 = vmatprep.subr.mxu0 0.0
    %1174 = vmatpush1.msra.mxu0 %v842
    %1175 = vmatprep.subr.mxu0 0.0
    %1176 = vmatpush1.msra.mxu0 %v841
    %1177 = vmatprep.subr.mxu0 0.0
    %1178 = vmatpush1.msra.mxu0 %v840
    %1179 = vmatprep.subr.mxu0 0.0
    %1180 = vmatpush1.msra.mxu0 %v839
    %1181 = vmatprep.subr.mxu0 0.0
    %1182 = vmatpush1.msra.mxu0 %v838
    %1183 = vmatprep.subr.mxu0 0.0
    %1184 = vmatpush1.msra.mxu0 %v837
    %1185 = vmatprep.subr.mxu0 0.0
    %1186 = vmatpush1.msra.mxu0 %v836
    %1187 = vmatprep.subr.mxu0 0.0
    %1188 = vmatpush1.msra.mxu0 %v835
    %1189 = vmatprep.subr.mxu0 0.0
    %1190 = vmatpush1.msra.mxu0 %v834
    %1191 = vmatprep.subr.mxu0 0.0
    %1192 = vmatpush1.msra.mxu0 %v833
    %1193 = vmatprep.subr.mxu0 0.0
    %1194 = vmatpush2.msra.mxu0 0.0
    %1195 = vmatprep.subr.mxu0 0.0
    %1196 = vmatpush2.msra.mxu0 0.0
    %1197 = vmatprep.subr.mxu0 0.0
    %1198 = vmatpush2.msra.mxu0 0.0
    %1199 = vmatprep.subr.mxu0 0.0
    %1200 = vmatpush2.msra.mxu0 0.0
    %1201 = vmatprep.subr.mxu0 0.0
    %1202 = vmatpush2.msra.mxu0 0.0
    %1203 = vmatprep.subr.mxu0 0.0
    %1204 = vmatpush2.msra.mxu0 0.0
    %1205 = vmatprep.subr.mxu0 0.0
    %1206 = vmatpush2.msra.mxu0 0.0
    %1207 = vmatprep.subr.mxu0 0.0
    %1208 = vmatpush2.msra.mxu0 0.0
    %1209 = vmatprep.subr.mxu0 0.0
    %1210 = vmatpush2.msra.mxu0 0.0
    %1211 = vmatprep.subr.mxu0 0.0
    %1212 = vmatpush2.msra.mxu0 0.0
    %1213 = vmatprep.subr.mxu0 0.0
    %1214 = vmatpush2.msra.mxu0 0.0
    %1215 = vmatprep.subr.mxu0 0.0
    %1216 = vmatpush2.msra.mxu0 0.0
    %1217 = vmatprep.subr.mxu0 0.0
    %1218 = vmatpush2.msra.mxu0 0.0
    %1219 = vmatprep.subr.mxu0 0.0
    %1220 = vmatpush2.msra.mxu0 0.0
    %1221 = vmatprep.subr.mxu0 0.0
    %1222 = vmatpush2.msra.mxu0 0.0
    %1223 = vmatprep.subr.mxu0 0.0
    %1224 = vmatpush2.msra.mxu0 0.0
    %1225 = vmatprep.mubr.f32.mxu0 0.0
    %1226 = vmatmul.mubr.f32.gmra.mxu0 %v1159
    %v1227 = vpop.f32.mrf.mxu0
    %v1228 = vadd.f32 0.0, %v1227
    %v1229 = vpop.f32.mrf.mxu0
    %1230 = vdwg.mxu0
    %v1232 = vrot.slane %v1228, 2
    %v1234 = vadd.f32 %v925, %v1232
    %v1235 = vtanh.pop %v1234
    %v1237 = vrot.slane %v1235, 6
    %1239 = vmatprep.subr.mxu0 0.0
    %1240 = vmatpush1.msra.mxu0 %v848
    %1241 = vmatprep.subr.mxu0 0.0
    %1242 = vmatpush1.msra.mxu0 %v847
    %1243 = vmatprep.subr.mxu0 0.0
    %1244 = vmatpush1.msra.mxu0 %v846
    %1245 = vmatprep.subr.mxu0 0.0
    %1246 = vmatpush1.msra.mxu0 %v845
    %1247 = vmatprep.subr.mxu0 0.0
    %1248 = vmatpush1.msra.mxu0 %v844
    %1249 = vmatprep.subr.mxu0 0.0
    %1250 = vmatpush1.msra.mxu0 %v843
    %1251 = vmatprep.subr.mxu0 0.0
    %1252 = vmatpush1.msra.mxu0 %v842
    %1253 = vmatprep.subr.mxu0 0.0
    %1254 = vmatpush1.msra.mxu0 %v841
    %1255 = vmatprep.subr.mxu0 0.0
    %1256 = vmatpush1.msra.mxu0 %v840
    %1257 = vmatprep.subr.mxu0 0.0
    %1258 = vmatpush1.msra.mxu0 %v839
    %1259 = vmatprep.subr.mxu0 0.0
    %1260 = vmatpush1.msra.mxu0 %v838
    %1261 = vmatprep.subr.mxu0 0.0
    %1262 = vmatpush1.msra.mxu0 %v837
    %1263 = vmatprep.subr.mxu0 0.0
    %1264 = vmatpush1.msra.mxu0 %v836
    %1265 = vmatprep.subr.mxu0 0.0
    %1266 = vmatpush1.msra.mxu0 %v835
    %1267 = vmatprep.subr.mxu0 0.0
    %1268 = vmatpush1.msra.mxu0 %v834
    %1269 = vmatprep.subr.mxu0 0.0
    %1270 = vmatpush1.msra.mxu0 %v833
    %1271 = vmatprep.subr.mxu0 0.0
    %1272 = vmatpush2.msra.mxu0 0.0
    %1273 = vmatprep.subr.mxu0 0.0
    %1274 = vmatpush2.msra.mxu0 0.0
    %1275 = vmatprep.subr.mxu0 0.0
    %1276 = vmatpush2.msra.mxu0 0.0
    %1277 = vmatprep.subr.mxu0 0.0
    %1278 = vmatpush2.msra.mxu0 0.0
    %1279 = vmatprep.subr.mxu0 0.0
    %1280 = vmatpush2.msra.mxu0 0.0
    %1281 = vmatprep.subr.mxu0 0.0
    %1282 = vmatpush2.msra.mxu0 0.0
    %1283 = vmatprep.subr.mxu0 0.0
    %1284 = vmatpush2.msra.mxu0 0.0
    %1285 = vmatprep.subr.mxu0 0.0
    %1286 = vmatpush2.msra.mxu0 0.0
    %1287 = vmatprep.subr.mxu0 0.0
    %1288 = vmatpush2.msra.mxu0 0.0
    %1289 = vmatprep.subr.mxu0 0.0
    %1290 = vmatpush2.msra.mxu0 0.0
    %1291 = vmatprep.subr.mxu0 0.0
    %1292 = vmatpush2.msra.mxu0 0.0
    %1293 = vmatprep.subr.mxu0 0.0
    %1294 = vmatpush2.msra.mxu0 0.0
    %1295 = vmatprep.subr.mxu0 0.0
    %1296 = vmatpush2.msra.mxu0 0.0
    %1297 = vmatprep.subr.mxu0 0.0
    %1298 = vmatpush2.msra.mxu0 0.0
    %1299 = vmatprep.subr.mxu0 0.0
    %1300 = vmatpush2.msra.mxu0 0.0
    %1301 = vmatprep.subr.mxu0 0.0
    %1302 = vmatpush2.msra.mxu0 0.0
    %1303 = vmatprep.mubr.f32.mxu0 0.0
    %1304 = vmatmul.mubr.f32.gmra.mxu0 %v1237
    %v1305 = vpop.f32.mrf.mxu0
    %v1306 = vadd.f32 0.0, %v1305
    %v1307 = vpop.f32.mrf.mxu0
    %1308 = vdwg.mxu0
    %v1309 = vadd.f32 %v930, %v1306
    %v1310 = vtanh.pop %v1309
    %1311 = vmatprep.subr.mxu0 0.0
    %1312 = vmatpush1.msra.mxu0 %v848
    %1313 = vmatprep.subr.mxu0 0.0
    %1314 = vmatpush1.msra.mxu0 %v847
    %1315 = vmatprep.subr.mxu0 0.0
    %1316 = vmatpush1.msra.mxu0 %v846
    %1317 = vmatprep.subr.mxu0 0.0
    %1318 = vmatpush1.msra.mxu0 %v845
    %1319 = vmatprep.subr.mxu0 0.0
    %1320 = vmatpush1.msra.mxu0 %v844
    %1321 = vmatprep.subr.mxu0 0.0
    %1322 = vmatpush1.msra.mxu0 %v843
    %1323 = vmatprep.subr.mxu0 0.0
    %1324 = vmatpush1.msra.mxu0 %v842
    %1325 = vmatprep.subr.mxu0 0.0
    %1326 = vmatpush1.msra.mxu0 %v841
    %1327 = vmatprep.subr.mxu0 0.0
    %1328 = vmatpush1.msra.mxu0 %v840
    %1329 = vmatprep.subr.mxu0 0.0
    %1330 = vmatpush1.msra.mxu0 %v839
    %1331 = vmatprep.subr.mxu0 0.0
    %1332 = vmatpush1.msra.mxu0 %v838
    %1333 = vmatprep.subr.mxu0 0.0
    %1334 = vmatpush1.msra.mxu0 %v837
    %1335 = vmatprep.subr.mxu0 0.0
    %1336 = vmatpush1.msra.mxu0 %v836
    %1337 = vmatprep.subr.mxu0 0.0
    %1338 = vmatpush1.msra.mxu0 %v835
    %1339 = vmatprep.subr.mxu0 0.0
    %1340 = vmatpush1.msra.mxu0 %v834
    %1341 = vmatprep.subr.mxu0 0.0
    %1342 = vmatpush1.msra.mxu0 %v833
    %1343 = vmatprep.subr.mxu0 0.0
    %1344 = vmatpush2.msra.mxu0 0.0
    %1345 = vmatprep.subr.mxu0 0.0
    %1346 = vmatpush2.msra.mxu0 0.0
    %1347 = vmatprep.subr.mxu0 0.0
    %1348 = vmatpush2.msra.mxu0 0.0
    %1349 = vmatprep.subr.mxu0 0.0
    %1350 = vmatpush2.msra.mxu0 0.0
    %1351 = vmatprep.subr.mxu0 0.0
    %1352 = vmatpush2.msra.mxu0 0.0
    %1353 = vmatprep.subr.mxu0 0.0
    %1354 = vmatpush2.msra.mxu0 0.0
    %1355 = vmatprep.subr.mxu0 0.0
    %1356 = vmatpush2.msra.mxu0 0.0
    %1357 = vmatprep.subr.mxu0 0.0
    %1358 = vmatpush2.msra.mxu0 0.0
    %1359 = vmatprep.subr.mxu0 0.0
    %1360 = vmatpush2.msra.mxu0 0.0
    %1361 = vmatprep.subr.mxu0 0.0
    %1362 = vmatpush2.msra.mxu0 0.0
    %1363 = vmatprep.subr.mxu0 0.0
    %1364 = vmatpush2.msra.mxu0 0.0
    %1365 = vmatprep.subr.mxu0 0.0
    %1366 = vmatpush2.msra.mxu0 0.0
    %1367 = vmatprep.subr.mxu0 0.0
    %1368 = vmatpush2.msra.mxu0 0.0
    %1369 = vmatprep.subr.mxu0 0.0
    %1370 = vmatpush2.msra.mxu0 0.0
    %1371 = vmatprep.subr.mxu0 0.0
    %1372 = vmatpush2.msra.mxu0 0.0
    %1373 = vmatprep.subr.mxu0 0.0
    %1374 = vmatpush2.msra.mxu0 0.0
    %1375 = vmatprep.mubr.f32.mxu0 0.0
    %1376 = vmatmul.mubr.f32.gmra.mxu0 %v1310
    %v1377 = vpop.f32.mrf.mxu0
    %v1378 = vadd.f32 0.0, %v1377
    %v1379 = vpop.f32.mrf.mxu0
    %1380 = vdwg.mxu0
    %v1382 = vrot.slane %v1378, 6
    %v1384 = vadd.f32 %v930, %v1382
    %v1385 = vtanh.pop %v1384
    %v1387 = vrot.slane %v1385, 2
    %1389 = vmatprep.subr.mxu0 0.0
    %1390 = vmatpush1.msra.mxu0 %v848
    %1391 = vmatprep.subr.mxu0 0.0
    %1392 = vmatpush1.msra.mxu0 %v847
    %1393 = vmatprep.subr.mxu0 0.0
    %1394 = vmatpush1.msra.mxu0 %v846
    %1395 = vmatprep.subr.mxu0 0.0
    %1396 = vmatpush1.msra.mxu0 %v845
    %1397 = vmatprep.subr.mxu0 0.0
    %1398 = vmatpush1.msra.mxu0 %v844
    %1399 = vmatprep.subr.mxu0 0.0
    %1400 = vmatpush1.msra.mxu0 %v843
    %1401 = vmatprep.subr.mxu0 0.0
    %1402 = vmatpush1.msra.mxu0 %v842
    %1403 = vmatprep.subr.mxu0 0.0
    %1404 = vmatpush1.msra.mxu0 %v841
    %1405 = vmatprep.subr.mxu0 0.0
    %1406 = vmatpush1.msra.mxu0 %v840
    %1407 = vmatprep.subr.mxu0 0.0
    %1408 = vmatpush1.msra.mxu0 %v839
    %1409 = vmatprep.subr.mxu0 0.0
    %1410 = vmatpush1.msra.mxu0 %v838
    %1411 = vmatprep.subr.mxu0 0.0
    %1412 = vmatpush1.msra.mxu0 %v837
    %1413 = vmatprep.subr.mxu0 0.0
    %1414 = vmatpush1.msra.mxu0 %v836
    %1415 = vmatprep.subr.mxu0 0.0
    %1416 = vmatpush1.msra.mxu0 %v835
    %1417 = vmatprep.subr.mxu0 0.0
    %1418 = vmatpush1.msra.mxu0 %v834
    %1419 = vmatprep.subr.mxu0 0.0
    %1420 = vmatpush1.msra.mxu0 %v833
    %1421 = vmatprep.subr.mxu0 0.0
    %1422 = vmatpush2.msra.mxu0 0.0
    %1423 = vmatprep.subr.mxu0 0.0
    %1424 = vmatpush2.msra.mxu0 0.0
    %1425 = vmatprep.subr.mxu0 0.0
    %1426 = vmatpush2.msra.mxu0 0.0
    %1427 = vmatprep.subr.mxu0 0.0
    %1428 = vmatpush2.msra.mxu0 0.0
    %1429 = vmatprep.subr.mxu0 0.0
    %1430 = vmatpush2.msra.mxu0 0.0
    %1431 = vmatprep.subr.mxu0 0.0
    %1432 = vmatpush2.msra.mxu0 0.0
    %1433 = vmatprep.subr.mxu0 0.0
    %1434 = vmatpush2.msra.mxu0 0.0
    %1435 = vmatprep.subr.mxu0 0.0
    %1436 = vmatpush2.msra.mxu0 0.0
    %1437 = vmatprep.subr.mxu0 0.0
    %1438 = vmatpush2.msra.mxu0 0.0
    %1439 = vmatprep.subr.mxu0 0.0
    %1440 = vmatpush2.msra.mxu0 0.0
    %1441 = vmatprep.subr.mxu0 0.0
    %1442 = vmatpush2.msra.mxu0 0.0
    %1443 = vmatprep.subr.mxu0 0.0
    %1444 = vmatpush2.msra.mxu0 0.0
    %1445 = vmatprep.subr.mxu0 0.0
    %1446 = vmatpush2.msra.mxu0 0.0
    %1447 = vmatprep.subr.mxu0 0.0
    %1448 = vmatpush2.msra.mxu0 0.0
    %1449 = vmatprep.subr.mxu0 0.0
    %1450 = vmatpush2.msra.mxu0 0.0
    %1451 = vmatprep.subr.mxu0 0.0
    %1452 = vmatpush2.msra.mxu0 0.0
    %1453 = vmatprep.mubr.f32.mxu0 0.0
    %1454 = vmatmul.mubr.f32.gmra.mxu0 %v1387
    %v1455 = vpop.f32.mrf.mxu0
    %v1456 = vadd.f32 0.0, %v1455
    %v1457 = vpop.f32.mrf.mxu0
    %1458 = vdwg.mxu0
    %v1460 = vrot.slane %v1456, 4
    %v1462 = vadd.f32 %v930, %v1460
    %v1463 = vtanh.pop %v1462
    %v1465 = vrot.slane %v1463, 4
    %1467 = vmatprep.subr.mxu0 0.0
    %1468 = vmatpush1.msra.mxu0 %v848
    %1469 = vmatprep.subr.mxu0 0.0
    %1470 = vmatpush1.msra.mxu0 %v847
    %1471 = vmatprep.subr.mxu0 0.0
    %1472 = vmatpush1.msra.mxu0 %v846
    %1473 = vmatprep.subr.mxu0 0.0
    %1474 = vmatpush1.msra.mxu0 %v845
    %1475 = vmatprep.subr.mxu0 0.0
    %1476 = vmatpush1.msra.mxu0 %v844
    %1477 = vmatprep.subr.mxu0 0.0
    %1478 = vmatpush1.msra.mxu0 %v843
    %1479 = vmatprep.subr.mxu0 0.0
    %1480 = vmatpush1.msra.mxu0 %v842
    %1481 = vmatprep.subr.mxu0 0.0
    %1482 = vmatpush1.msra.mxu0 %v841
    %1483 = vmatprep.subr.mxu0 0.0
    %1484 = vmatpush1.msra.mxu0 %v840
    %1485 = vmatprep.subr.mxu0 0.0
    %1486 = vmatpush1.msra.mxu0 %v839
    %1487 = vmatprep.subr.mxu0 0.0
    %1488 = vmatpush1.msra.mxu0 %v838
    %1489 = vmatprep.subr.mxu0 0.0
    %1490 = vmatpush1.msra.mxu0 %v837
    %1491 = vmatprep.subr.mxu0 0.0
    %1492 = vmatpush1.msra.mxu0 %v836
    %1493 = vmatprep.subr.mxu0 0.0
    %1494 = vmatpush1.msra.mxu0 %v835
    %1495 = vmatprep.subr.mxu0 0.0
    %1496 = vmatpush1.msra.mxu0 %v834
    %1497 = vmatprep.subr.mxu0 0.0
    %1498 = vmatpush1.msra.mxu0 %v833
    %1499 = vmatprep.subr.mxu0 0.0
    %1500 = vmatpush2.msra.mxu0 0.0
    %1501 = vmatprep.subr.mxu0 0.0
    %1502 = vmatpush2.msra.mxu0 0.0
    %1503 = vmatprep.subr.mxu0 0.0
    %1504 = vmatpush2.msra.mxu0 0.0
    %1505 = vmatprep.subr.mxu0 0.0
    %1506 = vmatpush2.msra.mxu0 0.0
    %1507 = vmatprep.subr.mxu0 0.0
    %1508 = vmatpush2.msra.mxu0 0.0
    %1509 = vmatprep.subr.mxu0 0.0
    %1510 = vmatpush2.msra.mxu0 0.0
    %1511 = vmatprep.subr.mxu0 0.0
    %1512 = vmatpush2.msra.mxu0 0.0
    %1513 = vmatprep.subr.mxu0 0.0
    %1514 = vmatpush2.msra.mxu0 0.0
    %1515 = vmatprep.subr.mxu0 0.0
    %1516 = vmatpush2.msra.mxu0 0.0
    %1517 = vmatprep.subr.mxu0 0.0
    %1518 = vmatpush2.msra.mxu0 0.0
    %1519 = vmatprep.subr.mxu0 0.0
    %1520 = vmatpush2.msra.mxu0 0.0
    %1521 = vmatprep.subr.mxu0 0.0
    %1522 = vmatpush2.msra.mxu0 0.0
    %1523 = vmatprep.subr.mxu0 0.0
    %1524 = vmatpush2.msra.mxu0 0.0
    %1525 = vmatprep.subr.mxu0 0.0
    %1526 = vmatpush2.msra.mxu0 0.0
    %1527 = vmatprep.subr.mxu0 0.0
    %1528 = vmatpush2.msra.mxu0 0.0
    %1529 = vmatprep.subr.mxu0 0.0
    %1530 = vmatpush2.msra.mxu0 0.0
    %1531 = vmatprep.mubr.f32.mxu0 0.0
    %1532 = vmatmul.mubr.f32.gmra.mxu0 %v1465
    %v1533 = vpop.f32.mrf.mxu0
    %v1534 = vadd.f32 0.0, %v1533
    %v1535 = vpop.f32.mrf.mxu0
    %1536 = vdwg.mxu0
    %v1538 = vrot.slane %v1534, 2
    %v1540 = vadd.f32 %v930, %v1538
    %v1541 = vtanh.pop %v1540
    %v1542 = vld [vmem:[#allocation9] sm:$0xff]
    %v1543 = vld [vmem:[#allocation9 + $0x8] sm:$0xff]
    %v1544 = vld [vmem:[#allocation9 + $0x10] sm:$0xff]
    %v1545 = vld [vmem:[#allocation9 + $0x18] sm:$0xff]
    %v1546 = vld [vmem:[#allocation9 + $0x20] sm:$0xff]
    %v1547 = vld [vmem:[#allocation9 + $0x28] sm:$0xff]
    %v1548 = vld [vmem:[#allocation9 + $0x30] sm:$0xff]
    %v1549 = vld [vmem:[#allocation9 + $0x38] sm:$0xff]
    %v1550 = vld [vmem:[#allocation9 + $0x40] sm:$0xff]
    %v1551 = vld [vmem:[#allocation9 + $0x48] sm:$0xff]
    %v1552 = vld [vmem:[#allocation9 + $0x50] sm:$0xff]
    %v1553 = vld [vmem:[#allocation9 + $0x58] sm:$0xff]
    %v1554 = vld [vmem:[#allocation9 + $0x60] sm:$0xff]
    %v1555 = vld [vmem:[#allocation9 + $0x68] sm:$0xff]
    %v1556 = vld [vmem:[#allocation9 + $0x70] sm:$0xff]
    %v1557 = vld [vmem:[#allocation9 + $0x78] sm:$0xff]
    %v1558 = vld [vmem:[%s8] sm:$0x1]
    %v1560 = vlaneseq
    %v1561 = vshrl.u32 %v1560, 7
    %v1562 = vsub.s32 0, %v1561
    %v1563 = vrot.slane %v1558, %v1562
    %v1566 = vrot.slane %v1541, 6
    %1568 = vmatprep.subr.mxu0 0.0
    %1569 = vmatpush1.msra.mxu0 %v1557
    %1570 = vmatprep.subr.mxu0 0.0
    %1571 = vmatpush1.msra.mxu0 %v1556
    %1572 = vmatprep.subr.mxu0 0.0
    %1573 = vmatpush1.msra.mxu0 %v1555
    %1574 = vmatprep.subr.mxu0 0.0
    %1575 = vmatpush1.msra.mxu0 %v1554
    %1576 = vmatprep.subr.mxu0 0.0
    %1577 = vmatpush1.msra.mxu0 %v1553
    %1578 = vmatprep.subr.mxu0 0.0
    %1579 = vmatpush1.msra.mxu0 %v1552
    %1580 = vmatprep.subr.mxu0 0.0
    %1581 = vmatpush1.msra.mxu0 %v1551
    %1582 = vmatprep.subr.mxu0 0.0
    %1583 = vmatpush1.msra.mxu0 %v1550
    %1584 = vmatprep.subr.mxu0 0.0
    %1585 = vmatpush1.msra.mxu0 %v1549
    %1586 = vmatprep.subr.mxu0 0.0
    %1587 = vmatpush1.msra.mxu0 %v1548
    %1588 = vmatprep.subr.mxu0 0.0
    %1589 = vmatpush1.msra.mxu0 %v1547
    %1590 = vmatprep.subr.mxu0 0.0
    %1591 = vmatpush1.msra.mxu0 %v1546
    %1592 = vmatprep.subr.mxu0 0.0
    %1593 = vmatpush1.msra.mxu0 %v1545
    %1594 = vmatprep.subr.mxu0 0.0
    %1595 = vmatpush1.msra.mxu0 %v1544
    %1596 = vmatprep.subr.mxu0 0.0
    %1597 = vmatpush1.msra.mxu0 %v1543
    %1598 = vmatprep.subr.mxu0 0.0
    %1599 = vmatpush1.msra.mxu0 %v1542
    %1600 = vmatprep.subr.mxu0 0.0
    %1601 = vmatpush2.msra.mxu0 0.0
    %1602 = vmatprep.subr.mxu0 0.0
    %1603 = vmatpush2.msra.mxu0 0.0
    %1604 = vmatprep.subr.mxu0 0.0
    %1605 = vmatpush2.msra.mxu0 0.0
    %1606 = vmatprep.subr.mxu0 0.0
    %1607 = vmatpush2.msra.mxu0 0.0
    %1608 = vmatprep.subr.mxu0 0.0
    %1609 = vmatpush2.msra.mxu0 0.0
    %1610 = vmatprep.subr.mxu0 0.0
    %1611 = vmatpush2.msra.mxu0 0.0
    %1612 = vmatprep.subr.mxu0 0.0
    %1613 = vmatpush2.msra.mxu0 0.0
    %1614 = vmatprep.subr.mxu0 0.0
    %1615 = vmatpush2.msra.mxu0 0.0
    %1616 = vmatprep.subr.mxu0 0.0
    %1617 = vmatpush2.msra.mxu0 0.0
    %1618 = vmatprep.subr.mxu0 0.0
    %1619 = vmatpush2.msra.mxu0 0.0
    %1620 = vmatprep.subr.mxu0 0.0
    %1621 = vmatpush2.msra.mxu0 0.0
    %1622 = vmatprep.subr.mxu0 0.0
    %1623 = vmatpush2.msra.mxu0 0.0
    %1624 = vmatprep.subr.mxu0 0.0
    %1625 = vmatpush2.msra.mxu0 0.0
    %1626 = vmatprep.subr.mxu0 0.0
    %1627 = vmatpush2.msra.mxu0 0.0
    %1628 = vmatprep.subr.mxu0 0.0
    %1629 = vmatpush2.msra.mxu0 0.0
    %1630 = vmatprep.subr.mxu0 0.0
    %1631 = vmatpush2.msra.mxu0 0.0
    %1632 = vmatprep.mubr.f32.mxu0 0.0
    %1633 = vmatmul.mubr.f32.gmra.mxu0 %v1566
    %v1634 = vpop.f32.mrf.mxu0
    %v1635 = vadd.f32 %v1563, %v1634
    %v1636 = vpop.f32.mrf.mxu0
    %1637 = vdwg.mxu0
    %1638 = vst [vmem:[#allocation11] sm:$0x3] %v1635
    // Predicated region
    $region54: #{tpu_custom_call.1} parent=1 // pred_check
      _
    $region55: #{tpu_custom_call.1} parent=1 // pred_check_branch
      %1640 = sbr.rel (0) target = $region57
    $region56: #{tpu_custom_call.1} parent=1 // pred_region
      %s1642 = ssub.s32 32, 32
      %1643 = vsyncadd [#allocation5], %s1642
      %s1645 = sshll.u32 [#allocation11], 4
      %s1646 = int_to_ptr.vmem [resolvable:$true] %s1645
      %1648 = dma.vmem_to_hbm [thread:$0]  %s1646, 32, %s9, [#allocation5]
    $region57: #{tpu_custom_call.1} parent=1 // pred_fallthru
      _
    // Predicated region
    $region58: #{tpu_custom_call.1} parent=1 // pred_check
      _
    $region59: #{tpu_custom_call.1} parent=1 // pred_check_branch
      %1650 = sbr.rel (0) target = $region61
    $region60: #{tpu_custom_call.1} parent=1 // pred_region
      %1651 = dma.done [#allocation5], 32
    $region61: #{tpu_custom_call.1} parent=1 // pred_fallthru
      _
    %1652 = vsyncpa [#allocation4], 1
    %1653 = vsyncpa [#allocation7], 1
    %1654 = vsyncpa [#allocation10], 1
    %1655 = vsyncpa [#allocation5], 1

</llo_original>
